<compile_context>
chip_gen: v7x
topology: tpu7x:2x2x1
jax: 0.10.0
libtpu: 0.0.40
codegen_flags: <defaults>
</compile_context>

<pallas_src>
import functools

import jax
import jax.numpy as jnp
from jax.experimental import pallas as pl
from jax.experimental.pallas import tpu as pltpu

# Synthetic surrogate sub-model dims: 3 in-channels (eps, re, im) -> 2 out (Ez re/im)
_CIN = 3
_COUT = 2


# ----------------------------------------------------------------------------
# In-kernel helpers
# ----------------------------------------------------------------------------
def _edge_masks(H, W):
    """Per-tap masks for a flat row-major H*W lane layout.

    The shifted window for tap (dy, dx) is a cyclic lane roll of the flat
    field; the mask zeroes (a) the output rows/columns that read outside the
    zero-padded 'same' halo and (b) every lane that wrapped around the cyclic
    roll (those always land inside the same rows/columns, so the combined
    row*col mask is exact).  Built once per kernel invocation (cheap iota ops).
    """
    HW = H * W
    lane = jax.lax.broadcasted_iota(jnp.int32, (1, HW), 1)
    col = lane % W
    cond = {
        (-1, 0): lane >= W,        # dy = -1: output row 0 invalid
        (+1, 0): lane < HW - W,    # dy = +1: output row H-1 invalid
        (0, -1): col != 0,         # dx = -1: output col 0 invalid
        (0, +1): col != W - 1,     # dx = +1: output col W-1 invalid
    }
    masks = {}
    for dy in (-1, 0, 1):
        for dx in (-1, 0, 1):
            parts = []
            if dy != 0:
                parts.append(cond[(dy, 0)])
            if dx != 0:
                parts.append(cond[(0, dx)])
            if not parts:
                masks[(dy, dx)] = None
            else:
                ok = parts[0]
                for p in parts[1:]:
                    ok = jnp.logical_and(ok, p)
                masks[(dy, dx)] = ok.astype(jnp.float32)
    return masks


def _conv3x3_roll(chans, w_ref, b_ref, masks, H, W):
    """3x3 zero-padded 'same' conv over _CIN register-resident channels.

    chans[ci] has shape (BB, HW).  Each shifted window is produced ONCE per
    (tap, channel) with pltpu.roll (XLU) — no VMEM window reads, no halo
    scratch — then reused for every output channel on the VPU.  Bias is folded
    into the accumulator init.  Channel counts are far too small for the MXU.
    """
    HW = H * W
    BB = chans[0].shape[0]
    acc = [jnp.full((BB, HW), b_ref[co], dtype=jnp.float32) for co in range(_COUT)]
    for dy in (-1, 0, 1):
        for dx in (-1, 0, 1):
            ky, kx = dy + 1, dx + 1
            # shifted[i] = x[(i + dy*W + dx) mod HW]  ==  roll(x, -(dy*W+dx))
            shift = (-(dy * W + dx)) % HW
            mask = masks[(dy, dx)]
            for ci in range(_CIN):
                win = chans[ci]
                if shift:
                    win = pltpu.roll(win, shift, axis=1)
                if mask is not None:
                    win = win * mask
                for co in range(_COUT):
                    wv = w_ref[((co * _CIN + ci) * 3 + ky) * 3 + kx]
                    acc[co] = acc[co] + wv * win
    return acc


# ----------------------------------------------------------------------------
# Fused kernel: conv_fwd -> total field / adj source -> conv_adj -> PML mask
# ----------------------------------------------------------------------------
def _fused_dual_predictor_kernel(*refs, H, W, use_pred):
    """Whole dual_predictor forward for one batch block, fully vreg-resident.

    Fields are handled in a flattened (BB, H*W) layout so every vector access
    is lane-dense (H*W = 256 lanes); BB is 1 (per-core, v7x) or B (fused,
    v5e/v6e) sublanes.
    """
    it = iter(refs)
    w_fwd_ref = next(it); b_fwd_ref = next(it)
    w_adj_ref = next(it); b_adj_ref = next(it)
    eps_ref = next(it); src_ref = next(it)
    prev_ref = None if use_pred else next(it)
    pml_fwd_ref = next(it); mon_ref = next(it); pml_adj_ref = next(it)
    fwd_field_ref = next(it); adj_field_ref = next(it); adj_src_ref = next(it)

    masks = _edge_masks(H, W)

    eps = eps_ref[:, 0, :]            # (BB, HW)
    src_re = src_ref[:, 0, :]
    src_im = src_ref[:, 1, :]

    # ---- model_fwd: predicted forward Ez field -------------------------------
    fwd_re, fwd_im = _conv3x3_roll([eps, src_re, src_im],
                                   w_fwd_ref, b_fwd_ref, masks, H, W)

    # ---- total forward field (PML mask) + adjoint source ---------------------
    pml_f = pml_fwd_ref[0]            # (1, HW), sublane-broadcast over BB
    fwd_field_ref[:, 0, :] = fwd_re * pml_f
    fwd_field_ref[:, 1, :] = fwd_im * pml_f

    if use_pred:                      # epoch >= switch_epoch
        ez_re, ez_im = fwd_re, fwd_im
    else:                             # stored forward field
        ez_re = prev_ref[:, 0, :]
        ez_im = prev_ref[:, 1, :]
    scale = eps * mon_ref[0]          # eps * monitor, computed once
    adj_re = ez_re * scale            # conj(Ez) * eps on the monitor
    adj_im = -(ez_im * scale)
    adj_src_ref[:, 0, :] = adj_re
    adj_src_ref[:, 1, :] = adj_im

    # ---- model_adj: adjoint Ez field ------------------------------------------
    # TODO(synk): the original .detach() of adj_source only affects gradients;
    # forward values are identical, so it is a no-op inside this fused forward.
    adj_ez_re, adj_ez_im = _conv3x3_roll([eps, adj_re, adj_im],
                                         w_adj_ref, b_adj_ref, masks, H, W)

    # ---- adjoint total field (return_adj_src=False path) ----------------------
    pml_a = pml_adj_ref[0]
    adj_field_ref[:, 0, :] = adj_ez_re * pml_a
    adj_field_ref[:, 1, :] = adj_ez_im * pml_a


# ----------------------------------------------------------------------------
# jitted wrapper (arrays only; `use_pred` / `batch_block` are static)
# ----------------------------------------------------------------------------
def _tensorcores_per_chip():
    """2 on v7x, 1 on v5e/v6e.  Detection failure -> 1 (batch-fused path,
    which is safe and optimal on a single core)."""
    try:
        kind = jax.devices()[0].device_kind.lower()
        if "v7" in kind or "7x" in kind:
            return 2
    except Exception:
        pass
    return 1


@functools.partial(jax.jit, static_argnames=("use_pred", "batch_block"))
def _forward_impl(eps, src, prev_tail, monitor, params, use_pred, batch_block):
    B, _, H, W = eps.shape
    HW = H * W
    BB = batch_block

    def flat(a):
        return a.astype(jnp.float32).reshape(a.shape[0], a.shape[1], HW)

    kernel = functools.partial(_fused_dual_predictor_kernel,
                               H=H, W=W, use_pred=use_pred)

    def per_b(c):
        return pl.BlockSpec((BB, c, HW), lambda i: (i, 0, 0))

    shared = pl.BlockSpec((1, 1, HW), lambda i: (0, 0, 0))
    smem = pl.BlockSpec(memory_space=pltpu.MemorySpace.SMEM)

    inputs = [
        params["w_fwd"].astype(jnp.float32).reshape(-1),
        params["b_fwd"].astype(jnp.float32),
        params["w_adj"].astype(jnp.float32).reshape(-1),
        params["b_adj"].astype(jnp.float32),
        flat(eps), flat(src),
    ]
    in_specs = [smem, smem, smem, smem, per_b(1), per_b(2)]
    if not use_pred:
        inputs.append(flat(prev_tail))       # only DMA'd on the stored-field path
        in_specs.append(per_b(2))
    inputs += [flat(params["pml_mask_fwd"]), flat(monitor),
               flat(params["pml_mask_adj"])]
    in_specs += [shared, shared, shared]

    n_in = 1 + 2 + (0 if use_pred else 2)                  # per-batch input chans
    cost = pl.CostEstimate(
        flops=int(B * HW * (2 * 2 * 9 * _CIN * _COUT + 16)),
        transcendentals=0,
        bytes_accessed=int(4 * (B * HW * (n_in + 3 * _COUT) + 3 * HW)))

    fwd_field, adj_field, adj_src = pl.pallas_call(
        kernel,
        out_shape=(jax.ShapeDtypeStruct((B, _COUT, HW), jnp.float32),
                   jax.ShapeDtypeStruct((B, _COUT, HW), jnp.float32),
                   jax.ShapeDtypeStruct((B, _COUT, HW), jnp.float32)),
        grid=(B // BB,),
        in_specs=in_specs,
        out_specs=(per_b(_COUT), per_b(_COUT), per_b(_COUT)),
        compiler_params=pltpu.CompilerParams(
            dimension_semantics=("parallel",)),  # one batch element per TC on v7x
        cost_estimate=cost,
    )(*inputs)

    def unflat(a):
        return a.reshape(B, _COUT, H, W)

    return {
        "forward_field": unflat(fwd_field),
        "adjoint_field": unflat(adj_field),
        # `.detach()` in the reference — forward values unchanged.
        "adjoint_source": jax.lax.stop_gradient(unflat(adj_src)),
    }


def dual_predictor_forward(data, params, epoch=1, switch_epoch=0):
    """Forward pass of `dual_predictor`.

    Non-array metadata (wavelength / mode / temp / input_slice /
    opt_cfg_file_path / ht_m / et_m) is consumed only by the unavailable
    sub-model / FDFD-solver internals, so it never enters the jitted graph.
    """
    use_pred = bool(epoch >= switch_epoch)
    # On the common (use_pred) path the stored field is not needed at all.
    prev_tail = None if use_pred else data["fwd_field"][:, -2:, ...]
    B = data["eps_map"].shape[0]
    # v7x: one batch element per TensorCore; v5e/v6e: fuse the batch into a
    # single grid step (stacked on the sublane axis).
    batch_block = 1 if (_tensorcores_per_chip() >= 2 and B > 1) else B
    return _forward_impl(data["eps_map"], data["src_profile"], prev_tail,
                         data["monitor_slices"], params, use_pred, batch_block)


# ----------------------------------------------------------------------------
# Pure-JAX reference (same surrogate semantics) for numerical verification
# ----------------------------------------------------------------------------
def _ref_conv3x3(x, w, b):
    B, Cin, H, W = x.shape
    Cout = w.shape[0]
    xp = jnp.pad(x.astype(jnp.float32), ((0, 0), (0, 0), (1, 1), (1, 1)))
    outs = []
    for co in range(Cout):
        acc = jnp.zeros((B, H, W), jnp.float32)
        for ci in range(Cin):
            for ky in range(3):
                for kx in range(3):
                    acc = acc + w[co, ci, ky, kx] * xp[:, ci, ky:ky + H, kx:kx + W]
        outs.append(acc + b[co])
    return jnp.stack(outs, axis=1)


def _ref_forward(data, params, epoch, switch_epoch):
    eps = data["eps_map"]
    src = data["src_profile"]
    mon = data["monitor_slices"]
    fwd_ez = _ref_conv3x3(jnp.concatenate([eps, src], axis=1),
                          params["w_fwd"], params["b_fwd"])
    ez4adj = fwd_ez if epoch >= switch_epoch else data["fwd_field"][:, -2:, ...]
    fwd_field = fwd_ez * params["pml_mask_fwd"]
    scale = eps * mon
    adj_src = jnp.concatenate([ez4adj[:, 0:1] * scale, -ez4adj[:, 1:2] * scale], axis=1)
    adj_ez = _ref_conv3x3(jnp.concatenate([eps, adj_src], axis=1),
                          params["w_adj"], params["b_adj"])
    adj_field = adj_ez * params["pml_mask_adj"]
    return {"forward_field": fwd_field, "adjoint_field": adj_field,
            "adjoint_source": adj_src}


# ----------------------------------------------------------------------------
# deterministic setup + smoke test
# ----------------------------------------------------------------------------
def _make_pml_mask(H, W):
    def taper(n):
        r = jnp.arange(n, dtype=jnp.float32)
        edge = jnp.minimum(r, n - 1 - r)
        return jnp.clip(edge / 3.0, 0.0, 1.0)
    return (taper(H)[:, None] * taper(W)[None, :]).reshape(1, 1, H, W)


def _check(name, got, want, tol=1e-4):
    err = float(jnp.max(jnp.abs(got - want)))
    scale = float(jnp.max(jnp.abs(want))) + 1.0
    assert err <= tol * scale, (name, err, scale)


if __name__ == "__main__":
    B, H, W = 2, 16, 16
    key = jax.random.PRNGKey(0)
    keys = jax.random.split(key, 6)

    eps_map = 1.0 + 11.0 * jax.random.uniform(keys[0], (B, 1, H, W), jnp.float32)
    src_profile = jax.random.normal(keys[1], (B, 2, H, W), jnp.float32)
    fwd_field_prev = jax.random.normal(keys[2], (B, 4, H, W), jnp.float32)
    monitor_slices = (jax.random.uniform(keys[3], (1, 1, H, W)) > 0.8).astype(jnp.float32)

    params = {
        "w_fwd": 0.1 * jax.random.normal(keys[4], (_COUT, _CIN, 3, 3), jnp.float32),
        "b_fwd": 0.01 * jnp.arange(_COUT, dtype=jnp.float32),
        "w_adj": 0.1 * jax.random.normal(keys[5], (_COUT, _CIN, 3, 3), jnp.float32),
        "b_adj": -0.01 * jnp.arange(_COUT, dtype=jnp.float32),
        "pml_mask_fwd": _make_pml_mask(H, W),
        "pml_mask_adj": _make_pml_mask(H, W),
    }

    data = {
        "eps_map": eps_map,
        "src_profile": src_profile,
        "fwd_field": fwd_field_prev,
        "monitor_slices": monitor_slices,
        # metadata consumed by the (unavailable) sub-model internals — ignored
        "wavelength": 1.55,
        "mode": 1,
        "temp": 300.0,
        "input_slice": "in_slice_1",
        "opt_cfg_file_path": None,
        "ht_m": None,
        "et_m": None,
    }

    # exercise both the predicted-field path and the stored-field path
    for epoch, switch_epoch in ((1, 0), (1, 5)):
        out = dual_predictor_forward(data, params, epoch=epoch, switch_epoch=switch_epoch)
        jax.block_until_ready(out)
        ref = _ref_forward(data, params, epoch, switch_epoch)
        for k in ("forward_field", "adjoint_field", "adjoint_source"):
            assert out[k].shape == (B, _COUT, H, W), (k, out[k].shape)
            _check(f"{k}@{epoch}/{switch_epoch}", out[k], ref[k])

    print("KERNEL_OK")
</pallas_src>

<mosaic_0001>
module attributes {stable_mosaic.version = 11 : i64} {
  func.func @_fused_dual_predictor_kernel(%arg0: i32, %arg1: memref<54xf32, #tpu.memory_space<smem>>, %arg2: memref<2xf32, #tpu.memory_space<smem>>, %arg3: memref<54xf32, #tpu.memory_space<smem>>, %arg4: memref<2xf32, #tpu.memory_space<smem>>, %arg5: memref<2x1x256xf32, #tpu.memory_space<vmem>>, %arg6: memref<2x2x256xf32, #tpu.memory_space<vmem>>, %arg7: memref<1x1x256xf32, #tpu.memory_space<vmem>>, %arg8: memref<1x1x256xf32, #tpu.memory_space<vmem>>, %arg9: memref<1x1x256xf32, #tpu.memory_space<vmem>>, %arg10: memref<2x2x256xf32, #tpu.memory_space<vmem>>, %arg11: memref<2x2x256xf32, #tpu.memory_space<vmem>>, %arg12: memref<2x2x256xf32, #tpu.memory_space<vmem>>) attributes {dimension_semantics = [#tpu.dimension_semantics<parallel>], iteration_bounds = array<i64: 1>, scalar_prefetch = 0 : i64, scratch_operands = 0 : i64, tpu.core_type = #tpu.core_type<tc>, window_params = [{transform_indices = @transform_0, window_bounds = array<i64: 54>}, {transform_indices = @transform_1, window_bounds = array<i64: 2>}, {transform_indices = @transform_2, window_bounds = array<i64: 54>}, {transform_indices = @transform_3, window_bounds = array<i64: 2>}, {transform_indices = @transform_4, window_bounds = array<i64: 2, 1, 256>}, {transform_indices = @transform_5, window_bounds = array<i64: 2, 2, 256>}, {pipeline_mode = #tpu.pipeline_mode<synchronous>, transform_indices = @transform_6, window_bounds = array<i64: 1, 1, 256>}, {pipeline_mode = #tpu.pipeline_mode<synchronous>, transform_indices = @transform_7, window_bounds = array<i64: 1, 1, 256>}, {pipeline_mode = #tpu.pipeline_mode<synchronous>, transform_indices = @transform_8, window_bounds = array<i64: 1, 1, 256>}, {transform_indices = @transform_9, window_bounds = array<i64: 2, 2, 256>}, {transform_indices = @transform_10, window_bounds = array<i64: 2, 2, 256>}, {transform_indices = @transform_11, window_bounds = array<i64: 2, 2, 256>}]} {
    %0 = tpu.iota {dimensions = array<i32: 1>} : vector<1x256xi32>
    %c16_i32 = arith.constant 16 : i32
    %c0_i32 = arith.constant 0 : i32
    %1 = arith.cmpi eq, %c16_i32, %c0_i32 : i32
    %c1_i32 = arith.constant 1 : i32
    %2 = arith.select %1, %c1_i32, %c16_i32 : i32
    %3 = vector.broadcast %2 : i32 to vector<1x256xi32>
    %4 = arith.remsi %0, %3 : vector<1x256xi32>
    %c0_i32_0 = arith.constant 0 : i32
    %5 = vector.broadcast %c0_i32_0 : i32 to vector<1x256xi32>
    %6 = arith.cmpi ne, %4, %5 : vector<1x256xi32>
    %c0_i32_1 = arith.constant 0 : i32
    %7 = vector.broadcast %c0_i32_1 : i32 to vector<1x256xi32>
    %8 = arith.cmpi slt, %4, %7 : vector<1x256xi32>
    %c0_i32_2 = arith.constant 0 : i32
    %9 = arith.cmpi slt, %2, %c0_i32_2 : i32
    %10 = vector.broadcast %9 : i1 to vector<1x256xi1>
    %11 = vector.broadcast %10 : vector<1x256xi1> to vector<1x256xi1>
    %12 = arith.xori %8, %11 : vector<1x256xi1>
    %13 = arith.andi %12, %6 : vector<1x256xi1>
    %14 = vector.broadcast %2 : i32 to vector<1x256xi32>
    %15 = arith.addi %4, %14 : vector<1x256xi32>
    %16 = arith.select %13, %15, %4 : vector<1x256xi1>, vector<1x256xi32>
    %c16_i32_3 = arith.constant 16 : i32
    %17 = vector.broadcast %c16_i32_3 : i32 to vector<1x256xi32>
    %18 = arith.cmpi sge, %0, %17 : vector<1x256xi32>
    %c240_i32 = arith.constant 240 : i32
    %19 = vector.broadcast %c240_i32 : i32 to vector<1x256xi32>
    %20 = arith.cmpi slt, %0, %19 : vector<1x256xi32>
    %c0_i32_4 = arith.constant 0 : i32
    %21 = vector.broadcast %c0_i32_4 : i32 to vector<1x256xi32>
    %22 = arith.cmpi ne, %16, %21 : vector<1x256xi32>
    %c15_i32 = arith.constant 15 : i32
    %23 = vector.broadcast %c15_i32 : i32 to vector<1x256xi32>
    %24 = arith.cmpi ne, %16, %23 : vector<1x256xi32>
    %25 = arith.andi %18, %22 : vector<1x256xi1>
    %26 = arith.extui %25 : vector<1x256xi1> to vector<1x256xi32>
    %27 = arith.sitofp %26 : vector<1x256xi32> to vector<1x256xf32>
    %28 = arith.extui %18 : vector<1x256xi1> to vector<1x256xi32>
    %29 = arith.sitofp %28 : vector<1x256xi32> to vector<1x256xf32>
    %30 = arith.andi %18, %24 : vector<1x256xi1>
    %31 = arith.extui %30 : vector<1x256xi1> to vector<1x256xi32>
    %32 = arith.sitofp %31 : vector<1x256xi32> to vector<1x256xf32>
    %33 = arith.extui %22 : vector<1x256xi1> to vector<1x256xi32>
    %34 = arith.sitofp %33 : vector<1x256xi32> to vector<1x256xf32>
    %35 = arith.extui %24 : vector<1x256xi1> to vector<1x256xi32>
    %36 = arith.sitofp %35 : vector<1x256xi32> to vector<1x256xf32>
    %37 = arith.andi %20, %22 : vector<1x256xi1>
    %38 = arith.extui %37 : vector<1x256xi1> to vector<1x256xi32>
    %39 = arith.sitofp %38 : vector<1x256xi32> to vector<1x256xf32>
    %40 = arith.extui %20 : vector<1x256xi1> to vector<1x256xi32>
    %41 = arith.sitofp %40 : vector<1x256xi32> to vector<1x256xf32>
    %42 = arith.andi %20, %24 : vector<1x256xi1>
    %43 = arith.extui %42 : vector<1x256xi1> to vector<1x256xi32>
    %44 = arith.sitofp %43 : vector<1x256xi32> to vector<1x256xf32>
    %c0 = arith.constant 0 : index
    %c0_5 = arith.constant 0 : index
    %c0_6 = arith.constant 0 : index
    %45 = vector.load %arg5[%c0, %c0_5, %c0_6] : memref<2x1x256xf32, #tpu.memory_space<vmem>>, vector<2x1x256xf32>
    %46 = vector.shape_cast %45 : vector<2x1x256xf32> to vector<2x256xf32>
    %c0_7 = arith.constant 0 : index
    %c0_8 = arith.constant 0 : index
    %c0_9 = arith.constant 0 : index
    %47 = vector.load %arg6[%c0_7, %c0_8, %c0_9] : memref<2x2x256xf32, #tpu.memory_space<vmem>>, vector<2x1x256xf32>
    %48 = vector.shape_cast %47 : vector<2x1x256xf32> to vector<2x256xf32>
    %c0_10 = arith.constant 0 : index
    %c1 = arith.constant 1 : index
    %c0_11 = arith.constant 0 : index
    %49 = vector.load %arg6[%c0_10, %c1, %c0_11] : memref<2x2x256xf32, #tpu.memory_space<vmem>>, vector<2x1x256xf32>
    %50 = vector.shape_cast %49 : vector<2x1x256xf32> to vector<2x256xf32>
    %c0_12 = arith.constant 0 : index
    %51 = memref.load %arg2[%c0_12] : memref<2xf32, #tpu.memory_space<smem>>
    %52 = vector.broadcast %51 : f32 to vector<2x256xf32>
    %c1_13 = arith.constant 1 : index
    %53 = memref.load %arg2[%c1_13] : memref<2xf32, #tpu.memory_space<smem>>
    %54 = vector.broadcast %53 : f32 to vector<2x256xf32>
    %c17_i32 = arith.constant 17 : i32
    %55 = tpu.dynamic_rotate %46 by %c17_i32 dim 1 : vector<2x256xf32>, i32 -> vector<2x256xf32>
    %56 = vector.broadcast %27 : vector<1x256xf32> to vector<2x256xf32>
    %57 = arith.mulf %55, %56 : vector<2x256xf32>
    %c0_14 = arith.constant 0 : index
    %58 = memref.load %arg1[%c0_14] : memref<54xf32, #tpu.memory_space<smem>>
    %59 = vector.broadcast %58 : f32 to vector<2x256xf32>
    %60 = arith.mulf %59, %57 : vector<2x256xf32>
    %61 = arith.addf %52, %60 : vector<2x256xf32>
    %c27 = arith.constant 27 : index
    %62 = memref.load %arg1[%c27] : memref<54xf32, #tpu.memory_space<smem>>
    %63 = vector.broadcast %62 : f32 to vector<2x256xf32>
    %64 = arith.mulf %63, %57 : vector<2x256xf32>
    %65 = arith.addf %54, %64 : vector<2x256xf32>
    %c17_i32_15 = arith.constant 17 : i32
    %66 = tpu.dynamic_rotate %48 by %c17_i32_15 dim 1 : vector<2x256xf32>, i32 -> vector<2x256xf32>
    %67 = vector.broadcast %27 : vector<1x256xf32> to vector<2x256xf32>
    %68 = arith.mulf %66, %67 : vector<2x256xf32>
    %c9 = arith.constant 9 : index
    %69 = memref.load %arg1[%c9] : memref<54xf32, #tpu.memory_space<smem>>
    %70 = vector.broadcast %69 : f32 to vector<2x256xf32>
    %71 = arith.mulf %70, %68 : vector<2x256xf32>
    %72 = arith.addf %61, %71 : vector<2x256xf32>
    %c36 = arith.constant 36 : index
    %73 = memref.load %arg1[%c36] : memref<54xf32, #tpu.memory_space<smem>>
    %74 = vector.broadcast %73 : f32 to vector<2x256xf32>
    %75 = arith.mulf %74, %68 : vector<2x256xf32>
    %76 = arith.addf %65, %75 : vector<2x256xf32>
    %c17_i32_16 = arith.constant 17 : i32
    %77 = tpu.dynamic_rotate %50 by %c17_i32_16 dim 1 : vector<2x256xf32>, i32 -> vector<2x256xf32>
    %78 = vector.broadcast %27 : vector<1x256xf32> to vector<2x256xf32>
    %79 = arith.mulf %77, %78 : vector<2x256xf32>
    %c18 = arith.constant 18 : index
    %80 = memref.load %arg1[%c18] : memref<54xf32, #tpu.memory_space<smem>>
    %81 = vector.broadcast %80 : f32 to vector<2x256xf32>
    %82 = arith.mulf %81, %79 : vector<2x256xf32>
    %83 = arith.addf %72, %82 : vector<2x256xf32>
    %c45 = arith.constant 45 : index
    %84 = memref.load %arg1[%c45] : memref<54xf32, #tpu.memory_space<smem>>
    %85 = vector.broadcast %84 : f32 to vector<2x256xf32>
    %86 = arith.mulf %85, %79 : vector<2x256xf32>
    %87 = arith.addf %76, %86 : vector<2x256xf32>
    %c16_i32_17 = arith.constant 16 : i32
    %88 = tpu.dynamic_rotate %46 by %c16_i32_17 dim 1 : vector<2x256xf32>, i32 -> vector<2x256xf32>
    %89 = vector.broadcast %29 : vector<1x256xf32> to vector<2x256xf32>
    %90 = arith.mulf %88, %89 : vector<2x256xf32>
    %c1_18 = arith.constant 1 : index
    %91 = memref.load %arg1[%c1_18] : memref<54xf32, #tpu.memory_space<smem>>
    %92 = vector.broadcast %91 : f32 to vector<2x256xf32>
    %93 = arith.mulf %92, %90 : vector<2x256xf32>
    %94 = arith.addf %83, %93 : vector<2x256xf32>
    %c28 = arith.constant 28 : index
    %95 = memref.load %arg1[%c28] : memref<54xf32, #tpu.memory_space<smem>>
    %96 = vector.broadcast %95 : f32 to vector<2x256xf32>
    %97 = arith.mulf %96, %90 : vector<2x256xf32>
    %98 = arith.addf %87, %97 : vector<2x256xf32>
    %c16_i32_19 = arith.constant 16 : i32
    %99 = tpu.dynamic_rotate %48 by %c16_i32_19 dim 1 : vector<2x256xf32>, i32 -> vector<2x256xf32>
    %100 = vector.broadcast %29 : vector<1x256xf32> to vector<2x256xf32>
    %101 = arith.mulf %99, %100 : vector<2x256xf32>
    %c10 = arith.constant 10 : index
    %102 = memref.load %arg1[%c10] : memref<54xf32, #tpu.memory_space<smem>>
    %103 = vector.broadcast %102 : f32 to vector<2x256xf32>
    %104 = arith.mulf %103, %101 : vector<2x256xf32>
    %105 = arith.addf %94, %104 : vector<2x256xf32>
    %c37 = arith.constant 37 : index
    %106 = memref.load %arg1[%c37] : memref<54xf32, #tpu.memory_space<smem>>
    %107 = vector.broadcast %106 : f32 to vector<2x256xf32>
    %108 = arith.mulf %107, %101 : vector<2x256xf32>
    %109 = arith.addf %98, %108 : vector<2x256xf32>
    %c16_i32_20 = arith.constant 16 : i32
    %110 = tpu.dynamic_rotate %50 by %c16_i32_20 dim 1 : vector<2x256xf32>, i32 -> vector<2x256xf32>
    %111 = vector.broadcast %29 : vector<1x256xf32> to vector<2x256xf32>
    %112 = arith.mulf %110, %111 : vector<2x256xf32>
    %c19 = arith.constant 19 : index
    %113 = memref.load %arg1[%c19] : memref<54xf32, #tpu.memory_space<smem>>
    %114 = vector.broadcast %113 : f32 to vector<2x256xf32>
    %115 = arith.mulf %114, %112 : vector<2x256xf32>
    %116 = arith.addf %105, %115 : vector<2x256xf32>
    %c46 = arith.constant 46 : index
    %117 = memref.load %arg1[%c46] : memref<54xf32, #tpu.memory_space<smem>>
    %118 = vector.broadcast %117 : f32 to vector<2x256xf32>
    %119 = arith.mulf %118, %112 : vector<2x256xf32>
    %120 = arith.addf %109, %119 : vector<2x256xf32>
    %c15_i32_21 = arith.constant 15 : i32
    %121 = tpu.dynamic_rotate %46 by %c15_i32_21 dim 1 : vector<2x256xf32>, i32 -> vector<2x256xf32>
    %122 = vector.broadcast %32 : vector<1x256xf32> to vector<2x256xf32>
    %123 = arith.mulf %121, %122 : vector<2x256xf32>
    %c2 = arith.constant 2 : index
    %124 = memref.load %arg1[%c2] : memref<54xf32, #tpu.memory_space<smem>>
    %125 = vector.broadcast %124 : f32 to vector<2x256xf32>
    %126 = arith.mulf %125, %123 : vector<2x256xf32>
    %127 = arith.addf %116, %126 : vector<2x256xf32>
    %c29 = arith.constant 29 : index
    %128 = memref.load %arg1[%c29] : memref<54xf32, #tpu.memory_space<smem>>
    %129 = vector.broadcast %128 : f32 to vector<2x256xf32>
    %130 = arith.mulf %129, %123 : vector<2x256xf32>
    %131 = arith.addf %120, %130 : vector<2x256xf32>
    %c15_i32_22 = arith.constant 15 : i32
    %132 = tpu.dynamic_rotate %48 by %c15_i32_22 dim 1 : vector<2x256xf32>, i32 -> vector<2x256xf32>
    %133 = vector.broadcast %32 : vector<1x256xf32> to vector<2x256xf32>
    %134 = arith.mulf %132, %133 : vector<2x256xf32>
    %c11 = arith.constant 11 : index
    %135 = memref.load %arg1[%c11] : memref<54xf32, #tpu.memory_space<smem>>
    %136 = vector.broadcast %135 : f32 to vector<2x256xf32>
    %137 = arith.mulf %136, %134 : vector<2x256xf32>
    %138 = arith.addf %127, %137 : vector<2x256xf32>
    %c38 = arith.constant 38 : index
    %139 = memref.load %arg1[%c38] : memref<54xf32, #tpu.memory_space<smem>>
    %140 = vector.broadcast %139 : f32 to vector<2x256xf32>
    %141 = arith.mulf %140, %134 : vector<2x256xf32>
    %142 = arith.addf %131, %141 : vector<2x256xf32>
    %c15_i32_23 = arith.constant 15 : i32
    %143 = tpu.dynamic_rotate %50 by %c15_i32_23 dim 1 : vector<2x256xf32>, i32 -> vector<2x256xf32>
    %144 = vector.broadcast %32 : vector<1x256xf32> to vector<2x256xf32>
    %145 = arith.mulf %143, %144 : vector<2x256xf32>
    %c20 = arith.constant 20 : index
    %146 = memref.load %arg1[%c20] : memref<54xf32, #tpu.memory_space<smem>>
    %147 = vector.broadcast %146 : f32 to vector<2x256xf32>
    %148 = arith.mulf %147, %145 : vector<2x256xf32>
    %149 = arith.addf %138, %148 : vector<2x256xf32>
    %c47 = arith.constant 47 : index
    %150 = memref.load %arg1[%c47] : memref<54xf32, #tpu.memory_space<smem>>
    %151 = vector.broadcast %150 : f32 to vector<2x256xf32>
    %152 = arith.mulf %151, %145 : vector<2x256xf32>
    %153 = arith.addf %142, %152 : vector<2x256xf32>
    %c1_i32_24 = arith.constant 1 : i32
    %154 = tpu.dynamic_rotate %46 by %c1_i32_24 dim 1 : vector<2x256xf32>, i32 -> vector<2x256xf32>
    %155 = vector.broadcast %34 : vector<1x256xf32> to vector<2x256xf32>
    %156 = arith.mulf %154, %155 : vector<2x256xf32>
    %c3 = arith.constant 3 : index
    %157 = memref.load %arg1[%c3] : memref<54xf32, #tpu.memory_space<smem>>
    %158 = vector.broadcast %157 : f32 to vector<2x256xf32>
    %159 = arith.mulf %158, %156 : vector<2x256xf32>
    %160 = arith.addf %149, %159 : vector<2x256xf32>
    %c30 = arith.constant 30 : index
    %161 = memref.load %arg1[%c30] : memref<54xf32, #tpu.memory_space<smem>>
    %162 = vector.broadcast %161 : f32 to vector<2x256xf32>
    %163 = arith.mulf %162, %156 : vector<2x256xf32>
    %164 = arith.addf %153, %163 : vector<2x256xf32>
    %c1_i32_25 = arith.constant 1 : i32
    %165 = tpu.dynamic_rotate %48 by %c1_i32_25 dim 1 : vector<2x256xf32>, i32 -> vector<2x256xf32>
    %166 = vector.broadcast %34 : vector<1x256xf32> to vector<2x256xf32>
    %167 = arith.mulf %165, %166 : vector<2x256xf32>
    %c12 = arith.constant 12 : index
    %168 = memref.load %arg1[%c12] : memref<54xf32, #tpu.memory_space<smem>>
    %169 = vector.broadcast %168 : f32 to vector<2x256xf32>
    %170 = arith.mulf %169, %167 : vector<2x256xf32>
    %171 = arith.addf %160, %170 : vector<2x256xf32>
    %c39 = arith.constant 39 : index
    %172 = memref.load %arg1[%c39] : memref<54xf32, #tpu.memory_space<smem>>
    %173 = vector.broadcast %172 : f32 to vector<2x256xf32>
    %174 = arith.mulf %173, %167 : vector<2x256xf32>
    %175 = arith.addf %164, %174 : vector<2x256xf32>
    %c1_i32_26 = arith.constant 1 : i32
    %176 = tpu.dynamic_rotate %50 by %c1_i32_26 dim 1 : vector<2x256xf32>, i32 -> vector<2x256xf32>
    %177 = vector.broadcast %34 : vector<1x256xf32> to vector<2x256xf32>
    %178 = arith.mulf %176, %177 : vector<2x256xf32>
    %c21 = arith.constant 21 : index
    %179 = memref.load %arg1[%c21] : memref<54xf32, #tpu.memory_space<smem>>
    %180 = vector.broadcast %179 : f32 to vector<2x256xf32>
    %181 = arith.mulf %180, %178 : vector<2x256xf32>
    %182 = arith.addf %171, %181 : vector<2x256xf32>
    %c48 = arith.constant 48 : index
    %183 = memref.load %arg1[%c48] : memref<54xf32, #tpu.memory_space<smem>>
    %184 = vector.broadcast %183 : f32 to vector<2x256xf32>
    %185 = arith.mulf %184, %178 : vector<2x256xf32>
    %186 = arith.addf %175, %185 : vector<2x256xf32>
    %c4 = arith.constant 4 : index
    %187 = memref.load %arg1[%c4] : memref<54xf32, #tpu.memory_space<smem>>
    %188 = vector.broadcast %187 : f32 to vector<2x256xf32>
    %189 = arith.mulf %188, %46 : vector<2x256xf32>
    %190 = arith.addf %182, %189 : vector<2x256xf32>
    %c31 = arith.constant 31 : index
    %191 = memref.load %arg1[%c31] : memref<54xf32, #tpu.memory_space<smem>>
    %192 = vector.broadcast %191 : f32 to vector<2x256xf32>
    %193 = arith.mulf %192, %46 : vector<2x256xf32>
    %194 = arith.addf %186, %193 : vector<2x256xf32>
    %c13 = arith.constant 13 : index
    %195 = memref.load %arg1[%c13] : memref<54xf32, #tpu.memory_space<smem>>
    %196 = vector.broadcast %195 : f32 to vector<2x256xf32>
    %197 = arith.mulf %196, %48 : vector<2x256xf32>
    %198 = arith.addf %190, %197 : vector<2x256xf32>
    %c40 = arith.constant 40 : index
    %199 = memref.load %arg1[%c40] : memref<54xf32, #tpu.memory_space<smem>>
    %200 = vector.broadcast %199 : f32 to vector<2x256xf32>
    %201 = arith.mulf %200, %48 : vector<2x256xf32>
    %202 = arith.addf %194, %201 : vector<2x256xf32>
    %c22 = arith.constant 22 : index
    %203 = memref.load %arg1[%c22] : memref<54xf32, #tpu.memory_space<smem>>
    %204 = vector.broadcast %203 : f32 to vector<2x256xf32>
    %205 = arith.mulf %204, %50 : vector<2x256xf32>
    %206 = arith.addf %198, %205 : vector<2x256xf32>
    %c49 = arith.constant 49 : index
    %207 = memref.load %arg1[%c49] : memref<54xf32, #tpu.memory_space<smem>>
    %208 = vector.broadcast %207 : f32 to vector<2x256xf32>
    %209 = arith.mulf %208, %50 : vector<2x256xf32>
    %210 = arith.addf %202, %209 : vector<2x256xf32>
    %c255_i32 = arith.constant 255 : i32
    %211 = tpu.dynamic_rotate %46 by %c255_i32 dim 1 : vector<2x256xf32>, i32 -> vector<2x256xf32>
    %212 = vector.broadcast %36 : vector<1x256xf32> to vector<2x256xf32>
    %213 = arith.mulf %211, %212 : vector<2x256xf32>
    %c5 = arith.constant 5 : index
    %214 = memref.load %arg1[%c5] : memref<54xf32, #tpu.memory_space<smem>>
    %215 = vector.broadcast %214 : f32 to vector<2x256xf32>
    %216 = arith.mulf %215, %213 : vector<2x256xf32>
    %217 = arith.addf %206, %216 : vector<2x256xf32>
    %c32 = arith.constant 32 : index
    %218 = memref.load %arg1[%c32] : memref<54xf32, #tpu.memory_space<smem>>
    %219 = vector.broadcast %218 : f32 to vector<2x256xf32>
    %220 = arith.mulf %219, %213 : vector<2x256xf32>
    %221 = arith.addf %210, %220 : vector<2x256xf32>
    %c255_i32_27 = arith.constant 255 : i32
    %222 = tpu.dynamic_rotate %48 by %c255_i32_27 dim 1 : vector<2x256xf32>, i32 -> vector<2x256xf32>
    %223 = vector.broadcast %36 : vector<1x256xf32> to vector<2x256xf32>
    %224 = arith.mulf %222, %223 : vector<2x256xf32>
    %c14 = arith.constant 14 : index
    %225 = memref.load %arg1[%c14] : memref<54xf32, #tpu.memory_space<smem>>
    %226 = vector.broadcast %225 : f32 to vector<2x256xf32>
    %227 = arith.mulf %226, %224 : vector<2x256xf32>
    %228 = arith.addf %217, %227 : vector<2x256xf32>
    %c41 = arith.constant 41 : index
    %229 = memref.load %arg1[%c41] : memref<54xf32, #tpu.memory_space<smem>>
    %230 = vector.broadcast %229 : f32 to vector<2x256xf32>
    %231 = arith.mulf %230, %224 : vector<2x256xf32>
    %232 = arith.addf %221, %231 : vector<2x256xf32>
    %c255_i32_28 = arith.constant 255 : i32
    %233 = tpu.dynamic_rotate %50 by %c255_i32_28 dim 1 : vector<2x256xf32>, i32 -> vector<2x256xf32>
    %234 = vector.broadcast %36 : vector<1x256xf32> to vector<2x256xf32>
    %235 = arith.mulf %233, %234 : vector<2x256xf32>
    %c23 = arith.constant 23 : index
    %236 = memref.load %arg1[%c23] : memref<54xf32, #tpu.memory_space<smem>>
    %237 = vector.broadcast %236 : f32 to vector<2x256xf32>
    %238 = arith.mulf %237, %235 : vector<2x256xf32>
    %239 = arith.addf %228, %238 : vector<2x256xf32>
    %c50 = arith.constant 50 : index
    %240 = memref.load %arg1[%c50] : memref<54xf32, #tpu.memory_space<smem>>
    %241 = vector.broadcast %240 : f32 to vector<2x256xf32>
    %242 = arith.mulf %241, %235 : vector<2x256xf32>
    %243 = arith.addf %232, %242 : vector<2x256xf32>
    %c241_i32 = arith.constant 241 : i32
    %244 = tpu.dynamic_rotate %46 by %c241_i32 dim 1 : vector<2x256xf32>, i32 -> vector<2x256xf32>
    %245 = vector.broadcast %39 : vector<1x256xf32> to vector<2x256xf32>
    %246 = arith.mulf %244, %245 : vector<2x256xf32>
    %c6 = arith.constant 6 : index
    %247 = memref.load %arg1[%c6] : memref<54xf32, #tpu.memory_space<smem>>
    %248 = vector.broadcast %247 : f32 to vector<2x256xf32>
    %249 = arith.mulf %248, %246 : vector<2x256xf32>
    %250 = arith.addf %239, %249 : vector<2x256xf32>
    %c33 = arith.constant 33 : index
    %251 = memref.load %arg1[%c33] : memref<54xf32, #tpu.memory_space<smem>>
    %252 = vector.broadcast %251 : f32 to vector<2x256xf32>
    %253 = arith.mulf %252, %246 : vector<2x256xf32>
    %254 = arith.addf %243, %253 : vector<2x256xf32>
    %c241_i32_29 = arith.constant 241 : i32
    %255 = tpu.dynamic_rotate %48 by %c241_i32_29 dim 1 : vector<2x256xf32>, i32 -> vector<2x256xf32>
    %256 = vector.broadcast %39 : vector<1x256xf32> to vector<2x256xf32>
    %257 = arith.mulf %255, %256 : vector<2x256xf32>
    %c15 = arith.constant 15 : index
    %258 = memref.load %arg1[%c15] : memref<54xf32, #tpu.memory_space<smem>>
    %259 = vector.broadcast %258 : f32 to vector<2x256xf32>
    %260 = arith.mulf %259, %257 : vector<2x256xf32>
    %261 = arith.addf %250, %260 : vector<2x256xf32>
    %c42 = arith.constant 42 : index
    %262 = memref.load %arg1[%c42] : memref<54xf32, #tpu.memory_space<smem>>
    %263 = vector.broadcast %262 : f32 to vector<2x256xf32>
    %264 = arith.mulf %263, %257 : vector<2x256xf32>
    %265 = arith.addf %254, %264 : vector<2x256xf32>
    %c241_i32_30 = arith.constant 241 : i32
    %266 = tpu.dynamic_rotate %50 by %c241_i32_30 dim 1 : vector<2x256xf32>, i32 -> vector<2x256xf32>
    %267 = vector.broadcast %39 : vector<1x256xf32> to vector<2x256xf32>
    %268 = arith.mulf %266, %267 : vector<2x256xf32>
    %c24 = arith.constant 24 : index
    %269 = memref.load %arg1[%c24] : memref<54xf32, #tpu.memory_space<smem>>
    %270 = vector.broadcast %269 : f32 to vector<2x256xf32>
    %271 = arith.mulf %270, %268 : vector<2x256xf32>
    %272 = arith.addf %261, %271 : vector<2x256xf32>
    %c51 = arith.constant 51 : index
    %273 = memref.load %arg1[%c51] : memref<54xf32, #tpu.memory_space<smem>>
    %274 = vector.broadcast %273 : f32 to vector<2x256xf32>
    %275 = arith.mulf %274, %268 : vector<2x256xf32>
    %276 = arith.addf %265, %275 : vector<2x256xf32>
    %c240_i32_31 = arith.constant 240 : i32
    %277 = tpu.dynamic_rotate %46 by %c240_i32_31 dim 1 : vector<2x256xf32>, i32 -> vector<2x256xf32>
    %278 = vector.broadcast %41 : vector<1x256xf32> to vector<2x256xf32>
    %279 = arith.mulf %277, %278 : vector<2x256xf32>
    %c7 = arith.constant 7 : index
    %280 = memref.load %arg1[%c7] : memref<54xf32, #tpu.memory_space<smem>>
    %281 = vector.broadcast %280 : f32 to vector<2x256xf32>
    %282 = arith.mulf %281, %279 : vector<2x256xf32>
    %283 = arith.addf %272, %282 : vector<2x256xf32>
    %c34 = arith.constant 34 : index
    %284 = memref.load %arg1[%c34] : memref<54xf32, #tpu.memory_space<smem>>
    %285 = vector.broadcast %284 : f32 to vector<2x256xf32>
    %286 = arith.mulf %285, %279 : vector<2x256xf32>
    %287 = arith.addf %276, %286 : vector<2x256xf32>
    %c240_i32_32 = arith.constant 240 : i32
    %288 = tpu.dynamic_rotate %48 by %c240_i32_32 dim 1 : vector<2x256xf32>, i32 -> vector<2x256xf32>
    %289 = vector.broadcast %41 : vector<1x256xf32> to vector<2x256xf32>
    %290 = arith.mulf %288, %289 : vector<2x256xf32>
    %c16 = arith.constant 16 : index
    %291 = memref.load %arg1[%c16] : memref<54xf32, #tpu.memory_space<smem>>
    %292 = vector.broadcast %291 : f32 to vector<2x256xf32>
    %293 = arith.mulf %292, %290 : vector<2x256xf32>
    %294 = arith.addf %283, %293 : vector<2x256xf32>
    %c43 = arith.constant 43 : index
    %295 = memref.load %arg1[%c43] : memref<54xf32, #tpu.memory_space<smem>>
    %296 = vector.broadcast %295 : f32 to vector<2x256xf32>
    %297 = arith.mulf %296, %290 : vector<2x256xf32>
    %298 = arith.addf %287, %297 : vector<2x256xf32>
    %c240_i32_33 = arith.constant 240 : i32
    %299 = tpu.dynamic_rotate %50 by %c240_i32_33 dim 1 : vector<2x256xf32>, i32 -> vector<2x256xf32>
    %300 = vector.broadcast %41 : vector<1x256xf32> to vector<2x256xf32>
    %301 = arith.mulf %299, %300 : vector<2x256xf32>
    %c25 = arith.constant 25 : index
    %302 = memref.load %arg1[%c25] : memref<54xf32, #tpu.memory_space<smem>>
    %303 = vector.broadcast %302 : f32 to vector<2x256xf32>
    %304 = arith.mulf %303, %301 : vector<2x256xf32>
    %305 = arith.addf %294, %304 : vector<2x256xf32>
    %c52 = arith.constant 52 : index
    %306 = memref.load %arg1[%c52] : memref<54xf32, #tpu.memory_space<smem>>
    %307 = vector.broadcast %306 : f32 to vector<2x256xf32>
    %308 = arith.mulf %307, %301 : vector<2x256xf32>
    %309 = arith.addf %298, %308 : vector<2x256xf32>
    %c239_i32 = arith.constant 239 : i32
    %310 = tpu.dynamic_rotate %46 by %c239_i32 dim 1 : vector<2x256xf32>, i32 -> vector<2x256xf32>
    %311 = vector.broadcast %44 : vector<1x256xf32> to vector<2x256xf32>
    %312 = arith.mulf %310, %311 : vector<2x256xf32>
    %c8 = arith.constant 8 : index
    %313 = memref.load %arg1[%c8] : memref<54xf32, #tpu.memory_space<smem>>
    %314 = vector.broadcast %313 : f32 to vector<2x256xf32>
    %315 = arith.mulf %314, %312 : vector<2x256xf32>
    %316 = arith.addf %305, %315 : vector<2x256xf32>
    %c35 = arith.constant 35 : index
    %317 = memref.load %arg1[%c35] : memref<54xf32, #tpu.memory_space<smem>>
    %318 = vector.broadcast %317 : f32 to vector<2x256xf32>
    %319 = arith.mulf %318, %312 : vector<2x256xf32>
    %320 = arith.addf %309, %319 : vector<2x256xf32>
    %c239_i32_34 = arith.constant 239 : i32
    %321 = tpu.dynamic_rotate %48 by %c239_i32_34 dim 1 : vector<2x256xf32>, i32 -> vector<2x256xf32>
    %322 = vector.broadcast %44 : vector<1x256xf32> to vector<2x256xf32>
    %323 = arith.mulf %321, %322 : vector<2x256xf32>
    %c17 = arith.constant 17 : index
    %324 = memref.load %arg1[%c17] : memref<54xf32, #tpu.memory_space<smem>>
    %325 = vector.broadcast %324 : f32 to vector<2x256xf32>
    %326 = arith.mulf %325, %323 : vector<2x256xf32>
    %327 = arith.addf %316, %326 : vector<2x256xf32>
    %c44 = arith.constant 44 : index
    %328 = memref.load %arg1[%c44] : memref<54xf32, #tpu.memory_space<smem>>
    %329 = vector.broadcast %328 : f32 to vector<2x256xf32>
    %330 = arith.mulf %329, %323 : vector<2x256xf32>
    %331 = arith.addf %320, %330 : vector<2x256xf32>
    %c239_i32_35 = arith.constant 239 : i32
    %332 = tpu.dynamic_rotate %50 by %c239_i32_35 dim 1 : vector<2x256xf32>, i32 -> vector<2x256xf32>
    %333 = vector.broadcast %44 : vector<1x256xf32> to vector<2x256xf32>
    %334 = arith.mulf %332, %333 : vector<2x256xf32>
    %c26 = arith.constant 26 : index
    %335 = memref.load %arg1[%c26] : memref<54xf32, #tpu.memory_space<smem>>
    %336 = vector.broadcast %335 : f32 to vector<2x256xf32>
    %337 = arith.mulf %336, %334 : vector<2x256xf32>
    %338 = arith.addf %327, %337 : vector<2x256xf32>
    %c53 = arith.constant 53 : index
    %339 = memref.load %arg1[%c53] : memref<54xf32, #tpu.memory_space<smem>>
    %340 = vector.broadcast %339 : f32 to vector<2x256xf32>
    %341 = arith.mulf %340, %334 : vector<2x256xf32>
    %342 = arith.addf %331, %341 : vector<2x256xf32>
    %c0_36 = arith.constant 0 : index
    %c0_37 = arith.constant 0 : index
    %c0_38 = arith.constant 0 : index
    %343 = vector.load %arg7[%c0_36, %c0_37, %c0_38] : memref<1x1x256xf32, #tpu.memory_space<vmem>>, vector<1x1x256xf32>
    %344 = vector.shape_cast %343 : vector<1x1x256xf32> to vector<1x256xf32>
    %345 = vector.broadcast %344 : vector<1x256xf32> to vector<2x256xf32>
    %346 = arith.mulf %338, %345 : vector<2x256xf32>
    %c0_39 = arith.constant 0 : index
    %c0_40 = arith.constant 0 : index
    %c0_41 = arith.constant 0 : index
    %347 = vector.load %arg10[%c0_39, %c0_40, %c0_41] : memref<2x2x256xf32, #tpu.memory_space<vmem>>, vector<2x1x256xf32>
    %348 = vector.shape_cast %347 : vector<2x1x256xf32> to vector<2x256xf32>
    %349 = vector.shape_cast %346 : vector<2x256xf32> to vector<2x1x256xf32>
    tpu.vector_store %arg10[%c0_39, %c0_40, %c0_41], %349 {strides = array<i32>} : memref<2x2x256xf32, #tpu.memory_space<vmem>>, vector<2x1x256xf32>,
    %350 = vector.broadcast %344 : vector<1x256xf32> to vector<2x256xf32>
    %351 = arith.mulf %342, %350 : vector<2x256xf32>
    %c0_42 = arith.constant 0 : index
    %c1_43 = arith.constant 1 : index
    %c0_44 = arith.constant 0 : index
    %352 = vector.load %arg10[%c0_42, %c1_43, %c0_44] : memref<2x2x256xf32, #tpu.memory_space<vmem>>, vector<2x1x256xf32>
    %353 = vector.shape_cast %352 : vector<2x1x256xf32> to vector<2x256xf32>
    %354 = vector.shape_cast %351 : vector<2x256xf32> to vector<2x1x256xf32>
    tpu.vector_store %arg10[%c0_42, %c1_43, %c0_44], %354 {strides = array<i32>} : memref<2x2x256xf32, #tpu.memory_space<vmem>>, vector<2x1x256xf32>,
    %c0_45 = arith.constant 0 : index
    %c0_46 = arith.constant 0 : index
    %c0_47 = arith.constant 0 : index
    %355 = vector.load %arg8[%c0_45, %c0_46, %c0_47] : memref<1x1x256xf32, #tpu.memory_space<vmem>>, vector<1x1x256xf32>
    %356 = vector.shape_cast %355 : vector<1x1x256xf32> to vector<1x256xf32>
    %357 = vector.broadcast %356 : vector<1x256xf32> to vector<2x256xf32>
    %358 = arith.mulf %46, %357 : vector<2x256xf32>
    %359 = arith.mulf %338, %358 : vector<2x256xf32>
    %360 = arith.mulf %342, %358 : vector<2x256xf32>
    %cst = arith.constant 0.000000e+00 : f32
    %361 = vector.broadcast %cst : f32 to vector<2x256xf32>
    %362 = arith.subf %361, %360 : vector<2x256xf32>
    %c0_48 = arith.constant 0 : index
    %c0_49 = arith.constant 0 : index
    %c0_50 = arith.constant 0 : index
    %363 = vector.load %arg12[%c0_48, %c0_49, %c0_50] : memref<2x2x256xf32, #tpu.memory_space<vmem>>, vector<2x1x256xf32>
    %364 = vector.shape_cast %363 : vector<2x1x256xf32> to vector<2x256xf32>
    %365 = vector.shape_cast %359 : vector<2x256xf32> to vector<2x1x256xf32>
    tpu.vector_store %arg12[%c0_48, %c0_49, %c0_50], %365 {strides = array<i32>} : memref<2x2x256xf32, #tpu.memory_space<vmem>>, vector<2x1x256xf32>,
    %c0_51 = arith.constant 0 : index
    %c1_52 = arith.constant 1 : index
    %c0_53 = arith.constant 0 : index
    %366 = vector.load %arg12[%c0_51, %c1_52, %c0_53] : memref<2x2x256xf32, #tpu.memory_space<vmem>>, vector<2x1x256xf32>
    %367 = vector.shape_cast %366 : vector<2x1x256xf32> to vector<2x256xf32>
    %368 = vector.shape_cast %362 : vector<2x256xf32> to vector<2x1x256xf32>
    tpu.vector_store %arg12[%c0_51, %c1_52, %c0_53], %368 {strides = array<i32>} : memref<2x2x256xf32, #tpu.memory_space<vmem>>, vector<2x1x256xf32>,
    %c0_54 = arith.constant 0 : index
    %369 = memref.load %arg4[%c0_54] : memref<2xf32, #tpu.memory_space<smem>>
    %370 = vector.broadcast %369 : f32 to vector<2x256xf32>
    %c1_55 = arith.constant 1 : index
    %371 = memref.load %arg4[%c1_55] : memref<2xf32, #tpu.memory_space<smem>>
    %372 = vector.broadcast %371 : f32 to vector<2x256xf32>
    %c17_i32_56 = arith.constant 17 : i32
    %373 = tpu.dynamic_rotate %46 by %c17_i32_56 dim 1 : vector<2x256xf32>, i32 -> vector<2x256xf32>
    %374 = vector.broadcast %27 : vector<1x256xf32> to vector<2x256xf32>
    %375 = arith.mulf %373, %374 : vector<2x256xf32>
    %c0_57 = arith.constant 0 : index
    %376 = memref.load %arg3[%c0_57] : memref<54xf32, #tpu.memory_space<smem>>
    %377 = vector.broadcast %376 : f32 to vector<2x256xf32>
    %378 = arith.mulf %377, %375 : vector<2x256xf32>
    %379 = arith.addf %370, %378 : vector<2x256xf32>
    %c27_58 = arith.constant 27 : index
    %380 = memref.load %arg3[%c27_58] : memref<54xf32, #tpu.memory_space<smem>>
    %381 = vector.broadcast %380 : f32 to vector<2x256xf32>
    %382 = arith.mulf %381, %375 : vector<2x256xf32>
    %383 = arith.addf %372, %382 : vector<2x256xf32>
    %c17_i32_59 = arith.constant 17 : i32
    %384 = tpu.dynamic_rotate %359 by %c17_i32_59 dim 1 : vector<2x256xf32>, i32 -> vector<2x256xf32>
    %385 = vector.broadcast %27 : vector<1x256xf32> to vector<2x256xf32>
    %386 = arith.mulf %384, %385 : vector<2x256xf32>
    %c9_60 = arith.constant 9 : index
    %387 = memref.load %arg3[%c9_60] : memref<54xf32, #tpu.memory_space<smem>>
    %388 = vector.broadcast %387 : f32 to vector<2x256xf32>
    %389 = arith.mulf %388, %386 : vector<2x256xf32>
    %390 = arith.addf %379, %389 : vector<2x256xf32>
    %c36_61 = arith.constant 36 : index
    %391 = memref.load %arg3[%c36_61] : memref<54xf32, #tpu.memory_space<smem>>
    %392 = vector.broadcast %391 : f32 to vector<2x256xf32>
    %393 = arith.mulf %392, %386 : vector<2x256xf32>
    %394 = arith.addf %383, %393 : vector<2x256xf32>
    %c17_i32_62 = arith.constant 17 : i32
    %395 = tpu.dynamic_rotate %362 by %c17_i32_62 dim 1 : vector<2x256xf32>, i32 -> vector<2x256xf32>
    %396 = vector.broadcast %27 : vector<1x256xf32> to vector<2x256xf32>
    %397 = arith.mulf %395, %396 : vector<2x256xf32>
    %c18_63 = arith.constant 18 : index
    %398 = memref.load %arg3[%c18_63] : memref<54xf32, #tpu.memory_space<smem>>
    %399 = vector.broadcast %398 : f32 to vector<2x256xf32>
    %400 = arith.mulf %399, %397 : vector<2x256xf32>
    %401 = arith.addf %390, %400 : vector<2x256xf32>
    %c45_64 = arith.constant 45 : index
    %402 = memref.load %arg3[%c45_64] : memref<54xf32, #tpu.memory_space<smem>>
    %403 = vector.broadcast %402 : f32 to vector<2x256xf32>
    %404 = arith.mulf %403, %397 : vector<2x256xf32>
    %405 = arith.addf %394, %404 : vector<2x256xf32>
    %c16_i32_65 = arith.constant 16 : i32
    %406 = tpu.dynamic_rotate %46 by %c16_i32_65 dim 1 : vector<2x256xf32>, i32 -> vector<2x256xf32>
    %407 = vector.broadcast %29 : vector<1x256xf32> to vector<2x256xf32>
    %408 = arith.mulf %406, %407 : vector<2x256xf32>
    %c1_66 = arith.constant 1 : index
    %409 = memref.load %arg3[%c1_66] : memref<54xf32, #tpu.memory_space<smem>>
    %410 = vector.broadcast %409 : f32 to vector<2x256xf32>
    %411 = arith.mulf %410, %408 : vector<2x256xf32>
    %412 = arith.addf %401, %411 : vector<2x256xf32>
    %c28_67 = arith.constant 28 : index
    %413 = memref.load %arg3[%c28_67] : memref<54xf32, #tpu.memory_space<smem>>
    %414 = vector.broadcast %413 : f32 to vector<2x256xf32>
    %415 = arith.mulf %414, %408 : vector<2x256xf32>
    %416 = arith.addf %405, %415 : vector<2x256xf32>
    %c16_i32_68 = arith.constant 16 : i32
    %417 = tpu.dynamic_rotate %359 by %c16_i32_68 dim 1 : vector<2x256xf32>, i32 -> vector<2x256xf32>
    %418 = vector.broadcast %29 : vector<1x256xf32> to vector<2x256xf32>
    %419 = arith.mulf %417, %418 : vector<2x256xf32>
    %c10_69 = arith.constant 10 : index
    %420 = memref.load %arg3[%c10_69] : memref<54xf32, #tpu.memory_space<smem>>
    %421 = vector.broadcast %420 : f32 to vector<2x256xf32>
    %422 = arith.mulf %421, %419 : vector<2x256xf32>
    %423 = arith.addf %412, %422 : vector<2x256xf32>
    %c37_70 = arith.constant 37 : index
    %424 = memref.load %arg3[%c37_70] : memref<54xf32, #tpu.memory_space<smem>>
    %425 = vector.broadcast %424 : f32 to vector<2x256xf32>
    %426 = arith.mulf %425, %419 : vector<2x256xf32>
    %427 = arith.addf %416, %426 : vector<2x256xf32>
    %c16_i32_71 = arith.constant 16 : i32
    %428 = tpu.dynamic_rotate %362 by %c16_i32_71 dim 1 : vector<2x256xf32>, i32 -> vector<2x256xf32>
    %429 = vector.broadcast %29 : vector<1x256xf32> to vector<2x256xf32>
    %430 = arith.mulf %428, %429 : vector<2x256xf32>
    %c19_72 = arith.constant 19 : index
    %431 = memref.load %arg3[%c19_72] : memref<54xf32, #tpu.memory_space<smem>>
    %432 = vector.broadcast %431 : f32 to vector<2x256xf32>
    %433 = arith.mulf %432, %430 : vector<2x256xf32>
    %434 = arith.addf %423, %433 : vector<2x256xf32>
    %c46_73 = arith.constant 46 : index
    %435 = memref.load %arg3[%c46_73] : memref<54xf32, #tpu.memory_space<smem>>
    %436 = vector.broadcast %435 : f32 to vector<2x256xf32>
    %437 = arith.mulf %436, %430 : vector<2x256xf32>
    %438 = arith.addf %427, %437 : vector<2x256xf32>
    %c15_i32_74 = arith.constant 15 : i32
    %439 = tpu.dynamic_rotate %46 by %c15_i32_74 dim 1 : vector<2x256xf32>, i32 -> vector<2x256xf32>
    %440 = vector.broadcast %32 : vector<1x256xf32> to vector<2x256xf32>
    %441 = arith.mulf %439, %440 : vector<2x256xf32>
    %c2_75 = arith.constant 2 : index
    %442 = memref.load %arg3[%c2_75] : memref<54xf32, #tpu.memory_space<smem>>
    %443 = vector.broadcast %442 : f32 to vector<2x256xf32>
    %444 = arith.mulf %443, %441 : vector<2x256xf32>
    %445 = arith.addf %434, %444 : vector<2x256xf32>
    %c29_76 = arith.constant 29 : index
    %446 = memref.load %arg3[%c29_76] : memref<54xf32, #tpu.memory_space<smem>>
    %447 = vector.broadcast %446 : f32 to vector<2x256xf32>
    %448 = arith.mulf %447, %441 : vector<2x256xf32>
    %449 = arith.addf %438, %448 : vector<2x256xf32>
    %c15_i32_77 = arith.constant 15 : i32
    %450 = tpu.dynamic_rotate %359 by %c15_i32_77 dim 1 : vector<2x256xf32>, i32 -> vector<2x256xf32>
    %451 = vector.broadcast %32 : vector<1x256xf32> to vector<2x256xf32>
    %452 = arith.mulf %450, %451 : vector<2x256xf32>
    %c11_78 = arith.constant 11 : index
    %453 = memref.load %arg3[%c11_78] : memref<54xf32, #tpu.memory_space<smem>>
    %454 = vector.broadcast %453 : f32 to vector<2x256xf32>
    %455 = arith.mulf %454, %452 : vector<2x256xf32>
    %456 = arith.addf %445, %455 : vector<2x256xf32>
    %c38_79 = arith.constant 38 : index
    %457 = memref.load %arg3[%c38_79] : memref<54xf32, #tpu.memory_space<smem>>
    %458 = vector.broadcast %457 : f32 to vector<2x256xf32>
    %459 = arith.mulf %458, %452 : vector<2x256xf32>
    %460 = arith.addf %449, %459 : vector<2x256xf32>
    %c15_i32_80 = arith.constant 15 : i32
    %461 = tpu.dynamic_rotate %362 by %c15_i32_80 dim 1 : vector<2x256xf32>, i32 -> vector<2x256xf32>
    %462 = vector.broadcast %32 : vector<1x256xf32> to vector<2x256xf32>
    %463 = arith.mulf %461, %462 : vector<2x256xf32>
    %c20_81 = arith.constant 20 : index
    %464 = memref.load %arg3[%c20_81] : memref<54xf32, #tpu.memory_space<smem>>
    %465 = vector.broadcast %464 : f32 to vector<2x256xf32>
    %466 = arith.mulf %465, %463 : vector<2x256xf32>
    %467 = arith.addf %456, %466 : vector<2x256xf32>
    %c47_82 = arith.constant 47 : index
    %468 = memref.load %arg3[%c47_82] : memref<54xf32, #tpu.memory_space<smem>>
    %469 = vector.broadcast %468 : f32 to vector<2x256xf32>
    %470 = arith.mulf %469, %463 : vector<2x256xf32>
    %471 = arith.addf %460, %470 : vector<2x256xf32>
    %c1_i32_83 = arith.constant 1 : i32
    %472 = tpu.dynamic_rotate %46 by %c1_i32_83 dim 1 : vector<2x256xf32>, i32 -> vector<2x256xf32>
    %473 = vector.broadcast %34 : vector<1x256xf32> to vector<2x256xf32>
    %474 = arith.mulf %472, %473 : vector<2x256xf32>
    %c3_84 = arith.constant 3 : index
    %475 = memref.load %arg3[%c3_84] : memref<54xf32, #tpu.memory_space<smem>>
    %476 = vector.broadcast %475 : f32 to vector<2x256xf32>
    %477 = arith.mulf %476, %474 : vector<2x256xf32>
    %478 = arith.addf %467, %477 : vector<2x256xf32>
    %c30_85 = arith.constant 30 : index
    %479 = memref.load %arg3[%c30_85] : memref<54xf32, #tpu.memory_space<smem>>
    %480 = vector.broadcast %479 : f32 to vector<2x256xf32>
    %481 = arith.mulf %480, %474 : vector<2x256xf32>
    %482 = arith.addf %471, %481 : vector<2x256xf32>
    %c1_i32_86 = arith.constant 1 : i32
    %483 = tpu.dynamic_rotate %359 by %c1_i32_86 dim 1 : vector<2x256xf32>, i32 -> vector<2x256xf32>
    %484 = vector.broadcast %34 : vector<1x256xf32> to vector<2x256xf32>
    %485 = arith.mulf %483, %484 : vector<2x256xf32>
    %c12_87 = arith.constant 12 : index
    %486 = memref.load %arg3[%c12_87] : memref<54xf32, #tpu.memory_space<smem>>
    %487 = vector.broadcast %486 : f32 to vector<2x256xf32>
    %488 = arith.mulf %487, %485 : vector<2x256xf32>
    %489 = arith.addf %478, %488 : vector<2x256xf32>
    %c39_88 = arith.constant 39 : index
    %490 = memref.load %arg3[%c39_88] : memref<54xf32, #tpu.memory_space<smem>>
    %491 = vector.broadcast %490 : f32 to vector<2x256xf32>
    %492 = arith.mulf %491, %485 : vector<2x256xf32>
    %493 = arith.addf %482, %492 : vector<2x256xf32>
    %c1_i32_89 = arith.constant 1 : i32
    %494 = tpu.dynamic_rotate %362 by %c1_i32_89 dim 1 : vector<2x256xf32>, i32 -> vector<2x256xf32>
    %495 = vector.broadcast %34 : vector<1x256xf32> to vector<2x256xf32>
    %496 = arith.mulf %494, %495 : vector<2x256xf32>
    %c21_90 = arith.constant 21 : index
    %497 = memref.load %arg3[%c21_90] : memref<54xf32, #tpu.memory_space<smem>>
    %498 = vector.broadcast %497 : f32 to vector<2x256xf32>
    %499 = arith.mulf %498, %496 : vector<2x256xf32>
    %500 = arith.addf %489, %499 : vector<2x256xf32>
    %c48_91 = arith.constant 48 : index
    %501 = memref.load %arg3[%c48_91] : memref<54xf32, #tpu.memory_space<smem>>
    %502 = vector.broadcast %501 : f32 to vector<2x256xf32>
    %503 = arith.mulf %502, %496 : vector<2x256xf32>
    %504 = arith.addf %493, %503 : vector<2x256xf32>
    %c4_92 = arith.constant 4 : index
    %505 = memref.load %arg3[%c4_92] : memref<54xf32, #tpu.memory_space<smem>>
    %506 = vector.broadcast %505 : f32 to vector<2x256xf32>
    %507 = arith.mulf %506, %46 : vector<2x256xf32>
    %508 = arith.addf %500, %507 : vector<2x256xf32>
    %c31_93 = arith.constant 31 : index
    %509 = memref.load %arg3[%c31_93] : memref<54xf32, #tpu.memory_space<smem>>
    %510 = vector.broadcast %509 : f32 to vector<2x256xf32>
    %511 = arith.mulf %510, %46 : vector<2x256xf32>
    %512 = arith.addf %504, %511 : vector<2x256xf32>
    %c13_94 = arith.constant 13 : index
    %513 = memref.load %arg3[%c13_94] : memref<54xf32, #tpu.memory_space<smem>>
    %514 = vector.broadcast %513 : f32 to vector<2x256xf32>
    %515 = arith.mulf %514, %359 : vector<2x256xf32>
    %516 = arith.addf %508, %515 : vector<2x256xf32>
    %c40_95 = arith.constant 40 : index
    %517 = memref.load %arg3[%c40_95] : memref<54xf32, #tpu.memory_space<smem>>
    %518 = vector.broadcast %517 : f32 to vector<2x256xf32>
    %519 = arith.mulf %518, %359 : vector<2x256xf32>
    %520 = arith.addf %512, %519 : vector<2x256xf32>
    %c22_96 = arith.constant 22 : index
    %521 = memref.load %arg3[%c22_96] : memref<54xf32, #tpu.memory_space<smem>>
    %522 = vector.broadcast %521 : f32 to vector<2x256xf32>
    %523 = arith.mulf %522, %362 : vector<2x256xf32>
    %524 = arith.addf %516, %523 : vector<2x256xf32>
    %c49_97 = arith.constant 49 : index
    %525 = memref.load %arg3[%c49_97] : memref<54xf32, #tpu.memory_space<smem>>
    %526 = vector.broadcast %525 : f32 to vector<2x256xf32>
    %527 = arith.mulf %526, %362 : vector<2x256xf32>
    %528 = arith.addf %520, %527 : vector<2x256xf32>
    %c255_i32_98 = arith.constant 255 : i32
    %529 = tpu.dynamic_rotate %46 by %c255_i32_98 dim 1 : vector<2x256xf32>, i32 -> vector<2x256xf32>
    %530 = vector.broadcast %36 : vector<1x256xf32> to vector<2x256xf32>
    %531 = arith.mulf %529, %530 : vector<2x256xf32>
    %c5_99 = arith.constant 5 : index
    %532 = memref.load %arg3[%c5_99] : memref<54xf32, #tpu.memory_space<smem>>
    %533 = vector.broadcast %532 : f32 to vector<2x256xf32>
    %534 = arith.mulf %533, %531 : vector<2x256xf32>
    %535 = arith.addf %524, %534 : vector<2x256xf32>
    %c32_100 = arith.constant 32 : index
    %536 = memref.load %arg3[%c32_100] : memref<54xf32, #tpu.memory_space<smem>>
    %537 = vector.broadcast %536 : f32 to vector<2x256xf32>
    %538 = arith.mulf %537, %531 : vector<2x256xf32>
    %539 = arith.addf %528, %538 : vector<2x256xf32>
    %c255_i32_101 = arith.constant 255 : i32
    %540 = tpu.dynamic_rotate %359 by %c255_i32_101 dim 1 : vector<2x256xf32>, i32 -> vector<2x256xf32>
    %541 = vector.broadcast %36 : vector<1x256xf32> to vector<2x256xf32>
    %542 = arith.mulf %540, %541 : vector<2x256xf32>
    %c14_102 = arith.constant 14 : index
    %543 = memref.load %arg3[%c14_102] : memref<54xf32, #tpu.memory_space<smem>>
    %544 = vector.broadcast %543 : f32 to vector<2x256xf32>
    %545 = arith.mulf %544, %542 : vector<2x256xf32>
    %546 = arith.addf %535, %545 : vector<2x256xf32>
    %c41_103 = arith.constant 41 : index
    %547 = memref.load %arg3[%c41_103] : memref<54xf32, #tpu.memory_space<smem>>
    %548 = vector.broadcast %547 : f32 to vector<2x256xf32>
    %549 = arith.mulf %548, %542 : vector<2x256xf32>
    %550 = arith.addf %539, %549 : vector<2x256xf32>
    %c255_i32_104 = arith.constant 255 : i32
    %551 = tpu.dynamic_rotate %362 by %c255_i32_104 dim 1 : vector<2x256xf32>, i32 -> vector<2x256xf32>
    %552 = vector.broadcast %36 : vector<1x256xf32> to vector<2x256xf32>
    %553 = arith.mulf %551, %552 : vector<2x256xf32>
    %c23_105 = arith.constant 23 : index
    %554 = memref.load %arg3[%c23_105] : memref<54xf32, #tpu.memory_space<smem>>
    %555 = vector.broadcast %554 : f32 to vector<2x256xf32>
    %556 = arith.mulf %555, %553 : vector<2x256xf32>
    %557 = arith.addf %546, %556 : vector<2x256xf32>
    %c50_106 = arith.constant 50 : index
    %558 = memref.load %arg3[%c50_106] : memref<54xf32, #tpu.memory_space<smem>>
    %559 = vector.broadcast %558 : f32 to vector<2x256xf32>
    %560 = arith.mulf %559, %553 : vector<2x256xf32>
    %561 = arith.addf %550, %560 : vector<2x256xf32>
    %c241_i32_107 = arith.constant 241 : i32
    %562 = tpu.dynamic_rotate %46 by %c241_i32_107 dim 1 : vector<2x256xf32>, i32 -> vector<2x256xf32>
    %563 = vector.broadcast %39 : vector<1x256xf32> to vector<2x256xf32>
    %564 = arith.mulf %562, %563 : vector<2x256xf32>
    %c6_108 = arith.constant 6 : index
    %565 = memref.load %arg3[%c6_108] : memref<54xf32, #tpu.memory_space<smem>>
    %566 = vector.broadcast %565 : f32 to vector<2x256xf32>
    %567 = arith.mulf %566, %564 : vector<2x256xf32>
    %568 = arith.addf %557, %567 : vector<2x256xf32>
    %c33_109 = arith.constant 33 : index
    %569 = memref.load %arg3[%c33_109] : memref<54xf32, #tpu.memory_space<smem>>
    %570 = vector.broadcast %569 : f32 to vector<2x256xf32>
    %571 = arith.mulf %570, %564 : vector<2x256xf32>
    %572 = arith.addf %561, %571 : vector<2x256xf32>
    %c241_i32_110 = arith.constant 241 : i32
    %573 = tpu.dynamic_rotate %359 by %c241_i32_110 dim 1 : vector<2x256xf32>, i32 -> vector<2x256xf32>
    %574 = vector.broadcast %39 : vector<1x256xf32> to vector<2x256xf32>
    %575 = arith.mulf %573, %574 : vector<2x256xf32>
    %c15_111 = arith.constant 15 : index
    %576 = memref.load %arg3[%c15_111] : memref<54xf32, #tpu.memory_space<smem>>
    %577 = vector.broadcast %576 : f32 to vector<2x256xf32>
    %578 = arith.mulf %577, %575 : vector<2x256xf32>
    %579 = arith.addf %568, %578 : vector<2x256xf32>
    %c42_112 = arith.constant 42 : index
    %580 = memref.load %arg3[%c42_112] : memref<54xf32, #tpu.memory_space<smem>>
    %581 = vector.broadcast %580 : f32 to vector<2x256xf32>
    %582 = arith.mulf %581, %575 : vector<2x256xf32>
    %583 = arith.addf %572, %582 : vector<2x256xf32>
    %c241_i32_113 = arith.constant 241 : i32
    %584 = tpu.dynamic_rotate %362 by %c241_i32_113 dim 1 : vector<2x256xf32>, i32 -> vector<2x256xf32>
    %585 = vector.broadcast %39 : vector<1x256xf32> to vector<2x256xf32>
    %586 = arith.mulf %584, %585 : vector<2x256xf32>
    %c24_114 = arith.constant 24 : index
    %587 = memref.load %arg3[%c24_114] : memref<54xf32, #tpu.memory_space<smem>>
    %588 = vector.broadcast %587 : f32 to vector<2x256xf32>
    %589 = arith.mulf %588, %586 : vector<2x256xf32>
    %590 = arith.addf %579, %589 : vector<2x256xf32>
    %c51_115 = arith.constant 51 : index
    %591 = memref.load %arg3[%c51_115] : memref<54xf32, #tpu.memory_space<smem>>
    %592 = vector.broadcast %591 : f32 to vector<2x256xf32>
    %593 = arith.mulf %592, %586 : vector<2x256xf32>
    %594 = arith.addf %583, %593 : vector<2x256xf32>
    %c240_i32_116 = arith.constant 240 : i32
    %595 = tpu.dynamic_rotate %46 by %c240_i32_116 dim 1 : vector<2x256xf32>, i32 -> vector<2x256xf32>
    %596 = vector.broadcast %41 : vector<1x256xf32> to vector<2x256xf32>
    %597 = arith.mulf %595, %596 : vector<2x256xf32>
    %c7_117 = arith.constant 7 : index
    %598 = memref.load %arg3[%c7_117] : memref<54xf32, #tpu.memory_space<smem>>
    %599 = vector.broadcast %598 : f32 to vector<2x256xf32>
    %600 = arith.mulf %599, %597 : vector<2x256xf32>
    %601 = arith.addf %590, %600 : vector<2x256xf32>
    %c34_118 = arith.constant 34 : index
    %602 = memref.load %arg3[%c34_118] : memref<54xf32, #tpu.memory_space<smem>>
    %603 = vector.broadcast %602 : f32 to vector<2x256xf32>
    %604 = arith.mulf %603, %597 : vector<2x256xf32>
    %605 = arith.addf %594, %604 : vector<2x256xf32>
    %c240_i32_119 = arith.constant 240 : i32
    %606 = tpu.dynamic_rotate %359 by %c240_i32_119 dim 1 : vector<2x256xf32>, i32 -> vector<2x256xf32>
    %607 = vector.broadcast %41 : vector<1x256xf32> to vector<2x256xf32>
    %608 = arith.mulf %606, %607 : vector<2x256xf32>
    %c16_120 = arith.constant 16 : index
    %609 = memref.load %arg3[%c16_120] : memref<54xf32, #tpu.memory_space<smem>>
    %610 = vector.broadcast %609 : f32 to vector<2x256xf32>
    %611 = arith.mulf %610, %608 : vector<2x256xf32>
    %612 = arith.addf %601, %611 : vector<2x256xf32>
    %c43_121 = arith.constant 43 : index
    %613 = memref.load %arg3[%c43_121] : memref<54xf32, #tpu.memory_space<smem>>
    %614 = vector.broadcast %613 : f32 to vector<2x256xf32>
    %615 = arith.mulf %614, %608 : vector<2x256xf32>
    %616 = arith.addf %605, %615 : vector<2x256xf32>
    %c240_i32_122 = arith.constant 240 : i32
    %617 = tpu.dynamic_rotate %362 by %c240_i32_122 dim 1 : vector<2x256xf32>, i32 -> vector<2x256xf32>
    %618 = vector.broadcast %41 : vector<1x256xf32> to vector<2x256xf32>
    %619 = arith.mulf %617, %618 : vector<2x256xf32>
    %c25_123 = arith.constant 25 : index
    %620 = memref.load %arg3[%c25_123] : memref<54xf32, #tpu.memory_space<smem>>
    %621 = vector.broadcast %620 : f32 to vector<2x256xf32>
    %622 = arith.mulf %621, %619 : vector<2x256xf32>
    %623 = arith.addf %612, %622 : vector<2x256xf32>
    %c52_124 = arith.constant 52 : index
    %624 = memref.load %arg3[%c52_124] : memref<54xf32, #tpu.memory_space<smem>>
    %625 = vector.broadcast %624 : f32 to vector<2x256xf32>
    %626 = arith.mulf %625, %619 : vector<2x256xf32>
    %627 = arith.addf %616, %626 : vector<2x256xf32>
    %c239_i32_125 = arith.constant 239 : i32
    %628 = tpu.dynamic_rotate %46 by %c239_i32_125 dim 1 : vector<2x256xf32>, i32 -> vector<2x256xf32>
    %629 = vector.broadcast %44 : vector<1x256xf32> to vector<2x256xf32>
    %630 = arith.mulf %628, %629 : vector<2x256xf32>
    %c8_126 = arith.constant 8 : index
    %631 = memref.load %arg3[%c8_126] : memref<54xf32, #tpu.memory_space<smem>>
    %632 = vector.broadcast %631 : f32 to vector<2x256xf32>
    %633 = arith.mulf %632, %630 : vector<2x256xf32>
    %634 = arith.addf %623, %633 : vector<2x256xf32>
    %c35_127 = arith.constant 35 : index
    %635 = memref.load %arg3[%c35_127] : memref<54xf32, #tpu.memory_space<smem>>
    %636 = vector.broadcast %635 : f32 to vector<2x256xf32>
    %637 = arith.mulf %636, %630 : vector<2x256xf32>
    %638 = arith.addf %627, %637 : vector<2x256xf32>
    %c239_i32_128 = arith.constant 239 : i32
    %639 = tpu.dynamic_rotate %359 by %c239_i32_128 dim 1 : vector<2x256xf32>, i32 -> vector<2x256xf32>
    %640 = vector.broadcast %44 : vector<1x256xf32> to vector<2x256xf32>
    %641 = arith.mulf %639, %640 : vector<2x256xf32>
    %c17_129 = arith.constant 17 : index
    %642 = memref.load %arg3[%c17_129] : memref<54xf32, #tpu.memory_space<smem>>
    %643 = vector.broadcast %642 : f32 to vector<2x256xf32>
    %644 = arith.mulf %643, %641 : vector<2x256xf32>
    %645 = arith.addf %634, %644 : vector<2x256xf32>
    %c44_130 = arith.constant 44 : index
    %646 = memref.load %arg3[%c44_130] : memref<54xf32, #tpu.memory_space<smem>>
    %647 = vector.broadcast %646 : f32 to vector<2x256xf32>
    %648 = arith.mulf %647, %641 : vector<2x256xf32>
    %649 = arith.addf %638, %648 : vector<2x256xf32>
    %c239_i32_131 = arith.constant 239 : i32
    %650 = tpu.dynamic_rotate %362 by %c239_i32_131 dim 1 : vector<2x256xf32>, i32 -> vector<2x256xf32>
    %651 = vector.broadcast %44 : vector<1x256xf32> to vector<2x256xf32>
    %652 = arith.mulf %650, %651 : vector<2x256xf32>
    %c26_132 = arith.constant 26 : index
    %653 = memref.load %arg3[%c26_132] : memref<54xf32, #tpu.memory_space<smem>>
    %654 = vector.broadcast %653 : f32 to vector<2x256xf32>
    %655 = arith.mulf %654, %652 : vector<2x256xf32>
    %656 = arith.addf %645, %655 : vector<2x256xf32>
    %c53_133 = arith.constant 53 : index
    %657 = memref.load %arg3[%c53_133] : memref<54xf32, #tpu.memory_space<smem>>
    %658 = vector.broadcast %657 : f32 to vector<2x256xf32>
    %659 = arith.mulf %658, %652 : vector<2x256xf32>
    %660 = arith.addf %649, %659 : vector<2x256xf32>
    %c0_134 = arith.constant 0 : index
    %c0_135 = arith.constant 0 : index
    %c0_136 = arith.constant 0 : index
    %661 = vector.load %arg9[%c0_134, %c0_135, %c0_136] : memref<1x1x256xf32, #tpu.memory_space<vmem>>, vector<1x1x256xf32>
    %662 = vector.shape_cast %661 : vector<1x1x256xf32> to vector<1x256xf32>
    %663 = vector.broadcast %662 : vector<1x256xf32> to vector<2x256xf32>
    %664 = arith.mulf %656, %663 : vector<2x256xf32>
    %c0_137 = arith.constant 0 : index
    %c0_138 = arith.constant 0 : index
    %c0_139 = arith.constant 0 : index
    %665 = vector.load %arg11[%c0_137, %c0_138, %c0_139] : memref<2x2x256xf32, #tpu.memory_space<vmem>>, vector<2x1x256xf32>
    %666 = vector.shape_cast %665 : vector<2x1x256xf32> to vector<2x256xf32>
    %667 = vector.shape_cast %664 : vector<2x256xf32> to vector<2x1x256xf32>
    tpu.vector_store %arg11[%c0_137, %c0_138, %c0_139], %667 {strides = array<i32>} : memref<2x2x256xf32, #tpu.memory_space<vmem>>, vector<2x1x256xf32>,
    %668 = vector.broadcast %662 : vector<1x256xf32> to vector<2x256xf32>
    %669 = arith.mulf %660, %668 : vector<2x256xf32>
    %c0_140 = arith.constant 0 : index
    %c1_141 = arith.constant 1 : index
    %c0_142 = arith.constant 0 : index
    %670 = vector.load %arg11[%c0_140, %c1_141, %c0_142] : memref<2x2x256xf32, #tpu.memory_space<vmem>>, vector<2x1x256xf32>
    %671 = vector.shape_cast %670 : vector<2x1x256xf32> to vector<2x256xf32>
    %672 = vector.shape_cast %669 : vector<2x256xf32> to vector<2x1x256xf32>
    tpu.vector_store %arg11[%c0_140, %c1_141, %c0_142], %672 {strides = array<i32>} : memref<2x2x256xf32, #tpu.memory_space<vmem>>, vector<2x1x256xf32>,
    return
  }
  func.func @transform_0(%arg0: i32) -> i32 {
    %c0_i32 = arith.constant 0 : i32
    %c0_i32_0 = arith.constant 0 : i32
    return %c0_i32 : i32
  }
  func.func @transform_1(%arg0: i32) -> i32 {
    %c0_i32 = arith.constant 0 : i32
    %c0_i32_0 = arith.constant 0 : i32
    return %c0_i32 : i32
  }
  func.func @transform_2(%arg0: i32) -> i32 {
    %c0_i32 = arith.constant 0 : i32
    %c0_i32_0 = arith.constant 0 : i32
    return %c0_i32 : i32
  }
  func.func @transform_3(%arg0: i32) -> i32 {
    %c0_i32 = arith.constant 0 : i32
    %c0_i32_0 = arith.constant 0 : i32
    return %c0_i32 : i32
  }
  func.func @transform_4(%arg0: i32) -> (i32, i32, i32) {
    %c0_i32 = arith.constant 0 : i32
    %c0_i32_0 = arith.constant 0 : i32
    %c0_i32_1 = arith.constant 0 : i32
    return %arg0, %c0_i32, %c0_i32_0 : i32, i32, i32
  }
  func.func @transform_5(%arg0: i32) -> (i32, i32, i32) {
    %c0_i32 = arith.constant 0 : i32
    %c0_i32_0 = arith.constant 0 : i32
    %c0_i32_1 = arith.constant 0 : i32
    return %arg0, %c0_i32, %c0_i32_0 : i32, i32, i32
  }
  func.func @transform_6(%arg0: i32) -> (i32, i32, i32) {
    %c0_i32 = arith.constant 0 : i32
    %c0_i32_0 = arith.constant 0 : i32
    %c0_i32_1 = arith.constant 0 : i32
    %c0_i32_2 = arith.constant 0 : i32
    return %c0_i32, %c0_i32_0, %c0_i32_1 : i32, i32, i32
  }
  func.func @transform_7(%arg0: i32) -> (i32, i32, i32) {
    %c0_i32 = arith.constant 0 : i32
    %c0_i32_0 = arith.constant 0 : i32
    %c0_i32_1 = arith.constant 0 : i32
    %c0_i32_2 = arith.constant 0 : i32
    return %c0_i32, %c0_i32_0, %c0_i32_1 : i32, i32, i32
  }
  func.func @transform_8(%arg0: i32) -> (i32, i32, i32) {
    %c0_i32 = arith.constant 0 : i32
    %c0_i32_0 = arith.constant 0 : i32
    %c0_i32_1 = arith.constant 0 : i32
    %c0_i32_2 = arith.constant 0 : i32
    return %c0_i32, %c0_i32_0, %c0_i32_1 : i32, i32, i32
  }
  func.func @transform_9(%arg0: i32) -> (i32, i32, i32) {
    %c0_i32 = arith.constant 0 : i32
    %c0_i32_0 = arith.constant 0 : i32
    %c0_i32_1 = arith.constant 0 : i32
    return %arg0, %c0_i32, %c0_i32_0 : i32, i32, i32
  }
  func.func @transform_10(%arg0: i32) -> (i32, i32, i32) {
    %c0_i32 = arith.constant 0 : i32
    %c0_i32_0 = arith.constant 0 : i32
    %c0_i32_1 = arith.constant 0 : i32
    return %arg0, %c0_i32, %c0_i32_0 : i32, i32, i32
  }
  func.func @transform_11(%arg0: i32) -> (i32, i32, i32) {
    %c0_i32 = arith.constant 0 : i32
    %c0_i32_0 = arith.constant 0 : i32
    %c0_i32_1 = arith.constant 0 : i32
    return %arg0, %c0_i32, %c0_i32_0 : i32, i32, i32
  }
}

</mosaic_0001>

<llo_original>
// kernel: _forward_impl.1
$region0: #{_forward_impl.1}
  #allocation0 [shape = 'u32[]', space=smem, size = 0x4, offset = 0x4, fixed_abs, tag = 'smem constant byte address 0x4 - core index']
  #allocation1 [shape = 'u32[144,128]{1,0:T(1,128)}', space=vmem, size = 0x12000, scoped, tag = 'internal scratch']
  %s0 = inlined_call_operand.vmem [shape: f32[54], index: 0, kind: input, shape index: {}]
  %s1 = inlined_call_operand.vmem [shape: f32[2], index: 1, kind: input, shape index: {}]
  %s2 = inlined_call_operand.vmem [shape: f32[54], index: 2, kind: input, shape index: {}]
  %s3 = inlined_call_operand.vmem [shape: f32[2], index: 3, kind: input, shape index: {}]
  %s4 = inlined_call_operand.vmem [shape: f32[2,1,256], index: 4, kind: input, shape index: {}]
  %s5 = inlined_call_operand.vmem [shape: f32[2,2,256], index: 5, kind: input, shape index: {}]
  %s6 = inlined_call_operand.vmem [shape: f32[1,1,256], index: 6, kind: input, shape index: {}]
  %s7 = inlined_call_operand.vmem [shape: f32[1,1,256], index: 7, kind: input, shape index: {}]
  %s8 = inlined_call_operand.vmem [shape: f32[1,1,256], index: 8, kind: input, shape index: {}]
  %s9 = inlined_call_operand.vmem [shape: f32[2,2,256], index: 9, kind: output, shape index: {0}]
  %s10 = inlined_call_operand.vmem [shape: f32[2,2,256], index: 10, kind: output, shape index: {1}]
  %s11 = inlined_call_operand.vmem [shape: f32[2,2,256], index: 11, kind: output, shape index: {2}]
  %12 = xla_tuple %s9, %s10, %s11
  %s13 = sld [smem:[#allocation0]]
  $region78: #{_forward_impl.1} parent=0
    _
  %s15 = ssub.s32 1, %s13
  %s16 = scalar_select 0, %s15, %s13
  $region1: #{_forward_impl.1} parent=0
    #allocation2 [shape = 'u8[512]{0}', space=smem, size = 0x200, scoped, tag = 'input window, operand 0, single buffered']
    #allocation3 [shape = 's32[1]{0}', space=sflag, size = 0x4, scoped, tag = 'scoped memory for _forward_impl.1']
    #allocation4 [shape = 'u8[512]{0}', space=smem, size = 0x200, scoped, tag = 'input window, operand 1, single buffered']
    #allocation5 [shape = 's32[1]{0}', space=sflag, size = 0x4, scoped, tag = 'scoped memory for _forward_impl.1']
    #allocation6 [shape = 'u8[512]{0}', space=smem, size = 0x200, scoped, tag = 'input window, operand 2, single buffered']
    #allocation7 [shape = 'u8[512]{0}', space=smem, size = 0x200, scoped, tag = 'input window, operand 3, single buffered']
    #allocation8 [shape = 's32[1]{0}', space=sflag, size = 0x4, scoped, tag = 'scoped memory for _forward_impl.1']
    %17 = vsyncpa [#allocation3], 0
    %18 = vsyncpa [#allocation5], 0
    %19 = vsyncpa [#allocation8], 0
    // Predicated region
    $region2: #{_forward_impl.1} parent=1 // pred_check
      _
    $region3: #{_forward_impl.1} parent=1 // pred_check_branch
      %21 = sbr.rel (0) target = $region5
    $region4: #{_forward_impl.1} parent=1 // pred_region
      %s23 = ssub.s32 16, 16
      %24 = vsyncadd [#allocation3], %s23
      %s26 = sshll.u32 %s0, 4
      %s27 = int_to_ptr.vmem [resolvable:$true] %s26
      %29 = dma.vmem_to_smem %s27, 16, [#allocation2], [#allocation3]
    $region5: #{_forward_impl.1} parent=1 // pred_fallthru
      _
    // Predicated region
    $region6: #{_forward_impl.1} parent=1 // pred_check
      _
    $region7: #{_forward_impl.1} parent=1 // pred_check_branch
      %31 = sbr.rel (0) target = $region9
    $region8: #{_forward_impl.1} parent=1 // pred_region
      %s33 = ssub.s32 16, 16
      %34 = vsyncadd [#allocation5], %s33
      %s36 = sshll.u32 %s1, 4
      %s37 = int_to_ptr.vmem [resolvable:$true] %s36
      %39 = dma.vmem_to_smem %s37, 16, [#allocation4], [#allocation5]
    $region9: #{_forward_impl.1} parent=1 // pred_fallthru
      _
    // Predicated region
    $region10: #{_forward_impl.1} parent=1 // pred_check
      _
    $region11: #{_forward_impl.1} parent=1 // pred_check_branch
      %41 = sbr.rel (0) target = $region13
    $region12: #{_forward_impl.1} parent=1 // pred_region
      %s43 = ssub.s32 16, 16
      %44 = vsyncadd [#allocation5], %s43
      %s46 = sshll.u32 %s2, 4
      %s47 = int_to_ptr.vmem [resolvable:$true] %s46
      %49 = dma.vmem_to_smem %s47, 16, [#allocation6], [#allocation5]
    $region13: #{_forward_impl.1} parent=1 // pred_fallthru
      _
    // Predicated region
    $region14: #{_forward_impl.1} parent=1 // pred_check
      _
    $region15: #{_forward_impl.1} parent=1 // pred_check_branch
      %51 = sbr.rel (0) target = $region17
    $region16: #{_forward_impl.1} parent=1 // pred_region
      %s53 = ssub.s32 16, 16
      %54 = vsyncadd [#allocation8], %s53
      %s56 = sshll.u32 %s3, 4
      %s57 = int_to_ptr.vmem [resolvable:$true] %s56
      %59 = dma.vmem_to_smem %s57, 16, [#allocation7], [#allocation8]
    $region17: #{_forward_impl.1} parent=1 // pred_fallthru
      _
    // Predicated region
    $region18: #{_forward_impl.1} parent=1 // pred_check
      _
    $region19: #{_forward_impl.1} parent=1 // pred_check_branch
      %61 = sbr.rel (0) target = $region21
    $region20: #{_forward_impl.1} parent=1 // pred_region
      _
    $region21: #{_forward_impl.1} parent=1 // pred_fallthru
      _
    // Predicated region
    $region22: #{_forward_impl.1} parent=1 // pred_check
      _
    $region23: #{_forward_impl.1} parent=1 // pred_check_branch
      %63 = sbr.rel (0) target = $region25
    $region24: #{_forward_impl.1} parent=1 // pred_region
      _
    $region25: #{_forward_impl.1} parent=1 // pred_fallthru
      _
    // Predicated region
    $region26: #{_forward_impl.1} parent=1 // pred_check
      _
    $region27: #{_forward_impl.1} parent=1 // pred_check_branch
      %65 = sbr.rel (0) target = $region29
    $region28: #{_forward_impl.1} parent=1 // pred_region
      _
    $region29: #{_forward_impl.1} parent=1 // pred_fallthru
      _
    // Predicated region
    $region30: #{_forward_impl.1} parent=1 // pred_check
      _
    $region31: #{_forward_impl.1} parent=1 // pred_check_branch
      %67 = sbr.rel (0) target = $region33
    $region32: #{_forward_impl.1} parent=1 // pred_region
      _
    $region33: #{_forward_impl.1} parent=1 // pred_fallthru
      _
    // Predicated region
    $region34: #{_forward_impl.1} parent=1 // pred_check
      _
    $region35: #{_forward_impl.1} parent=1 // pred_check_branch
      %69 = sbr.rel (0) target = $region37
    $region36: #{_forward_impl.1} parent=1 // pred_region
      _
    $region37: #{_forward_impl.1} parent=1 // pred_fallthru
      _
    // Predicated region
    $region38: #{_forward_impl.1} parent=1 // pred_check
      _
    $region39: #{_forward_impl.1} parent=1 // pred_check_branch
      %71 = sbr.rel (0) target = $region41
    $region40: #{_forward_impl.1} parent=1 // pred_region
      %72 = dma.done [#allocation3], 16
    $region41: #{_forward_impl.1} parent=1 // pred_fallthru
      _
    // Predicated region
    $region42: #{_forward_impl.1} parent=1 // pred_check
      _
    $region43: #{_forward_impl.1} parent=1 // pred_check_branch
      %74 = sbr.rel (0) target = $region45
    $region44: #{_forward_impl.1} parent=1 // pred_region
      %75 = dma.done [#allocation5], 16
    $region45: #{_forward_impl.1} parent=1 // pred_fallthru
      _
    // Predicated region
    $region46: #{_forward_impl.1} parent=1 // pred_check
      _
    $region47: #{_forward_impl.1} parent=1 // pred_check_branch
      %77 = sbr.rel (0) target = $region49
    $region48: #{_forward_impl.1} parent=1 // pred_region
      %78 = dma.done [#allocation5], 16
    $region49: #{_forward_impl.1} parent=1 // pred_fallthru
      _
    // Predicated region
    $region50: #{_forward_impl.1} parent=1 // pred_check
      _
    $region51: #{_forward_impl.1} parent=1 // pred_check_branch
      %80 = sbr.rel (0) target = $region53
    $region52: #{_forward_impl.1} parent=1 // pred_region
      %81 = dma.done [#allocation8], 16
    $region53: #{_forward_impl.1} parent=1 // pred_fallthru
      _
    %82 = sfence
    %v83 = vlaneseq
    %v84 = vand.u32 %v83, 127
    %v85 = vadd.s32 %v84, 128
    %vm86 = vcmp.lt.s32.totalorder %v84, 0
    %v87 = vsub.s32 0, %v84
    %v88 = vsel %vm86, %v87, %v84
    %v89 = vshrl.u32 %v88, 4
    %v90 = vand.u32 %v88, 15
    %v91 = vsub.s32 0, %v90
    %v92 = vsel %vm86, %v91, %v90
    %vm93 = vcmp.lt.s32.totalorder %v85, 0
    %v94 = vsub.s32 0, %v85
    %v95 = vsel %vm93, %v94, %v85
    %v96 = vshrl.u32 %v95, 4
    %v97 = vand.u32 %v95, 15
    %v98 = vsub.s32 0, %v97
    %v99 = vsel %vm93, %v98, %v97
    %vm100 = vcmp.ne.s32.totalorder %v92, 0
    %vm101 = vcmp.ne.s32.totalorder %v99, 0
    %vm102 = vcmp.lt.s32.totalorder %v92, 0
    %vm103 = vcmp.lt.s32.totalorder %v99, 0
    %vm104 = vmand %vm102, %vm100
    %vm105 = vmand %vm103, %vm101
    %v106 = vadd.s32 %v92, 16
    %v107 = vadd.s32 %v99, 16
    %v108 = vsel %vm104, %v106, %v92
    %v109 = vsel %vm105, %v107, %v99
    %vm110 = vcmp.ge.s32.totalorder %v84, 16
    %vm111 = vcmp.ge.s32.totalorder %v85, 16
    %vm112 = vcmp.lt.s32.totalorder %v84, 240
    %vm113 = vcmp.lt.s32.totalorder %v85, 240
    %vm114 = vcmp.ne.s32.totalorder %v108, 0
    %vm115 = vcmp.ne.s32.totalorder %v109, 0
    %vm116 = vcmp.ne.s32.totalorder %v108, 15
    %vm117 = vcmp.ne.s32.totalorder %v109, 15
    %vm118 = vmand %vm110, %vm114
    %vm119 = vmand %vm111, %vm115
    %v120 = vsel %vm118, 1, 0
    %v121 = vsel %vm119, 1, 0
    %v122 = vcvt.s32.f32 %v120
    %v123 = vcvt.s32.f32 %v121
    %v124 = vsel %vm110, 1, 0
    %v125 = vsel %vm111, 1, 0
    %v126 = vcvt.s32.f32 %v124
    %v127 = vcvt.s32.f32 %v125
    %vm128 = vmand %vm110, %vm116
    %vm129 = vmand %vm111, %vm117
    %v130 = vsel %vm128, 1, 0
    %v131 = vsel %vm129, 1, 0
    %v132 = vcvt.s32.f32 %v130
    %v133 = vcvt.s32.f32 %v131
    %v134 = vsel %vm114, 1, 0
    %v135 = vsel %vm115, 1, 0
    %v136 = vcvt.s32.f32 %v134
    %v137 = vcvt.s32.f32 %v135
    %v138 = vsel %vm116, 1, 0
    %v139 = vsel %vm117, 1, 0
    %v140 = vcvt.s32.f32 %v138
    %v141 = vcvt.s32.f32 %v139
    %vm142 = vmand %vm112, %vm114
    %vm143 = vmand %vm113, %vm115
    %v144 = vsel %vm142, 1, 0
    %v145 = vsel %vm143, 1, 0
    %v146 = vcvt.s32.f32 %v144
    %v147 = vcvt.s32.f32 %v145
    %v148 = vsel %vm112, 1, 0
    %v149 = vsel %vm113, 1, 0
    %v150 = vcvt.s32.f32 %v148
    %v151 = vcvt.s32.f32 %v149
    %vm152 = vmand %vm112, %vm116
    %vm153 = vmand %vm113, %vm117
    %v154 = vsel %vm152, 1, 0
    %v155 = vsel %vm153, 1, 0
    %v156 = vcvt.s32.f32 %v154
    %v157 = vcvt.s32.f32 %v155
    %v158 = vld [vmem:[%s4] sm:$0x3]
    %v159 = vld [vmem:[%s4 + $0x2] sm:$0x3]
    %v160 = vld [vmem:[%s5] ss:$2 sm:$0x3]
    %s161 = scalar_lea.vmem %s5, 4
    %v162 = vld [vmem:[%s161] ss:$2 sm:$0x3]
    %s163 = scalar_lea.vmem %s5, 1
    %v164 = vld [vmem:[%s163] ss:$2 sm:$0x3]
    %s165 = scalar_lea.vmem %s5, 5
    %v166 = vld [vmem:[%s165] ss:$2 sm:$0x3]
    %s167 = sld [smem:[#allocation4]]
    %v168 = vstv %s167
    %s169 = sld [smem:[#allocation4 + $0x1]]
    %v170 = vstv %s169
    %v173 = vcombine.low %v158, %v159
    %v175 = vunpack.c.l.s4 1966171168
    %v176 = vunpack.c.0.s8 %v175
    %v177 = vlaneseq
    %v178 = vshrl.u32 %v177, 7
    %v179 = vsub.s32 %v176, %v178
    %v180 = vrot.slane %v173, %v179
    %v181 = vcombine.high %v180, %v180
    %v183 = vunpack.c.l.s4 1966171168
    %v184 = vunpack.c.0.s8 %v183
    %v185 = vlaneseq
    %v186 = vshrl.u32 %v185, 7
    %v187 = vsub.s32 %v184, %v186
    %v188 = vrot.slane %v180, %v187
    %v190 = vunpack.c.l.s4 1966171168
    %v191 = vunpack.c.0.s8 %v190
    %v192 = vlaneseq
    %v193 = vshrl.u32 %v192, 7
    %v194 = vsub.s32 %v191, %v193
    %v195 = vrot.slane %v181, %v194
    %198 = vrot.lane.b32.xlu0 %v188, 17
    %v199 = vpop.permute.xlu0 %198
    %200 = vrot.lane.b32.xlu0 %v195, 17
    %v201 = vpop.permute.xlu0 %200
    %vm202 = vcmp.lt.s32.totalorder %v84, 17
    %v203 = vsel %vm202, %v199, %v201
    %v204 = vsel %vm202, %v201, %v199
    %v205 = vmul.f32 %v204, %v122
    %v206 = vmul.f32 %v203, %v123
    %s207 = sld [smem:[#allocation2]]
    %v208 = vstv %s207
    %v209 = vmul.f32 %v208, %v205
    %v210 = vmul.f32 %v208, %v206
    %v211 = vadd.f32 %v168, %v209
    %v212 = vadd.f32 %v168, %v210
    %s213 = sld [smem:[#allocation2 + $0x1b]]
    %v214 = vstv %s213
    %v215 = vmul.f32 %v214, %v205
    %v216 = vmul.f32 %v214, %v206
    %v217 = vadd.f32 %v170, %v215
    %v218 = vadd.f32 %v170, %v216
    %v221 = vcombine.low %v160, %v162
    %v223 = vunpack.c.l.s4 1966171168
    %v224 = vunpack.c.0.s8 %v223
    %v225 = vlaneseq
    %v226 = vshrl.u32 %v225, 7
    %v227 = vsub.s32 %v224, %v226
    %v228 = vrot.slane %v221, %v227
    %v229 = vcombine.high %v228, %v228
    %v231 = vunpack.c.l.s4 1966171168
    %v232 = vunpack.c.0.s8 %v231
    %v233 = vlaneseq
    %v234 = vshrl.u32 %v233, 7
    %v235 = vsub.s32 %v232, %v234
    %v236 = vrot.slane %v228, %v235
    %v238 = vunpack.c.l.s4 1966171168
    %v239 = vunpack.c.0.s8 %v238
    %v240 = vlaneseq
    %v241 = vshrl.u32 %v240, 7
    %v242 = vsub.s32 %v239, %v241
    %v243 = vrot.slane %v229, %v242
    %246 = vrot.lane.b32.xlu0 %v236, 17
    %v247 = vpop.permute.xlu0 %246
    %248 = vrot.lane.b32.xlu0 %v243, 17
    %v249 = vpop.permute.xlu0 %248
    %v250 = vsel %vm202, %v247, %v249
    %v251 = vsel %vm202, %v249, %v247
    %v252 = vmul.f32 %v251, %v122
    %v253 = vmul.f32 %v250, %v123
    %s254 = sld [smem:[#allocation2 + $0x9]]
    %v255 = vstv %s254
    %v256 = vmul.f32 %v255, %v252
    %v257 = vmul.f32 %v255, %v253
    %v258 = vadd.f32 %v211, %v256
    %v259 = vadd.f32 %v212, %v257
    %s260 = sld [smem:[#allocation2 + $0x24]]
    %v261 = vstv %s260
    %v262 = vmul.f32 %v261, %v252
    %v263 = vmul.f32 %v261, %v253
    %v264 = vadd.f32 %v217, %v262
    %v265 = vadd.f32 %v218, %v263
    %v268 = vcombine.low %v164, %v166
    %v270 = vunpack.c.l.s4 1966171168
    %v271 = vunpack.c.0.s8 %v270
    %v272 = vlaneseq
    %v273 = vshrl.u32 %v272, 7
    %v274 = vsub.s32 %v271, %v273
    %v275 = vrot.slane %v268, %v274
    %v276 = vcombine.high %v275, %v275
    %v278 = vunpack.c.l.s4 1966171168
    %v279 = vunpack.c.0.s8 %v278
    %v280 = vlaneseq
    %v281 = vshrl.u32 %v280, 7
    %v282 = vsub.s32 %v279, %v281
    %v283 = vrot.slane %v275, %v282
    %v285 = vunpack.c.l.s4 1966171168
    %v286 = vunpack.c.0.s8 %v285
    %v287 = vlaneseq
    %v288 = vshrl.u32 %v287, 7
    %v289 = vsub.s32 %v286, %v288
    %v290 = vrot.slane %v276, %v289
    %293 = vrot.lane.b32.xlu0 %v283, 17
    %v294 = vpop.permute.xlu0 %293
    %295 = vrot.lane.b32.xlu0 %v290, 17
    %v296 = vpop.permute.xlu0 %295
    %v297 = vsel %vm202, %v294, %v296
    %v298 = vsel %vm202, %v296, %v294
    %v299 = vmul.f32 %v298, %v122
    %v300 = vmul.f32 %v297, %v123
    %s301 = sld [smem:[#allocation2 + $0x12]]
    %v302 = vstv %s301
    %v303 = vmul.f32 %v302, %v299
    %v304 = vmul.f32 %v302, %v300
    %v305 = vadd.f32 %v258, %v303
    %v306 = vadd.f32 %v259, %v304
    %s307 = sld [smem:[#allocation2 + $0x2d]]
    %v308 = vstv %s307
    %v309 = vmul.f32 %v308, %v299
    %v310 = vmul.f32 %v308, %v300
    %v311 = vadd.f32 %v264, %v309
    %v312 = vadd.f32 %v265, %v310
    %313 = vrot.lane.b32.xlu0 %v188, 16
    %v314 = vpop.permute.xlu0 %313
    %315 = vrot.lane.b32.xlu0 %v195, 16
    %v316 = vpop.permute.xlu0 %315
    %vm317 = vcmp.lt.s32.totalorder %v84, 16
    %v318 = vsel %vm317, %v314, %v316
    %v319 = vsel %vm317, %v316, %v314
    %v320 = vmul.f32 %v319, %v126
    %v321 = vmul.f32 %v318, %v127
    %s322 = sld [smem:[#allocation2 + $0x1]]
    %v323 = vstv %s322
    %v324 = vmul.f32 %v323, %v320
    %v325 = vmul.f32 %v323, %v321
    %v326 = vadd.f32 %v305, %v324
    %v327 = vadd.f32 %v306, %v325
    %s328 = sld [smem:[#allocation2 + $0x1c]]
    %v329 = vstv %s328
    %v330 = vmul.f32 %v329, %v320
    %v331 = vmul.f32 %v329, %v321
    %v332 = vadd.f32 %v311, %v330
    %v333 = vadd.f32 %v312, %v331
    %334 = vrot.lane.b32.xlu0 %v236, 16
    %v335 = vpop.permute.xlu0 %334
    %336 = vrot.lane.b32.xlu0 %v243, 16
    %v337 = vpop.permute.xlu0 %336
    %v338 = vsel %vm317, %v335, %v337
    %v339 = vsel %vm317, %v337, %v335
    %v340 = vmul.f32 %v339, %v126
    %v341 = vmul.f32 %v338, %v127
    %s342 = sld [smem:[#allocation2 + $0xa]]
    %v343 = vstv %s342
    %v344 = vmul.f32 %v343, %v340
    %v345 = vmul.f32 %v343, %v341
    %v346 = vadd.f32 %v326, %v344
    %v347 = vadd.f32 %v327, %v345
    %s348 = sld [smem:[#allocation2 + $0x25]]
    %v349 = vstv %s348
    %v350 = vmul.f32 %v349, %v340
    %v351 = vmul.f32 %v349, %v341
    %v352 = vadd.f32 %v332, %v350
    %v353 = vadd.f32 %v333, %v351
    %354 = vrot.lane.b32.xlu0 %v283, 16
    %v355 = vpop.permute.xlu0 %354
    %356 = vrot.lane.b32.xlu0 %v290, 16
    %v357 = vpop.permute.xlu0 %356
    %v358 = vsel %vm317, %v355, %v357
    %v359 = vsel %vm317, %v357, %v355
    %v360 = vmul.f32 %v359, %v126
    %v361 = vmul.f32 %v358, %v127
    %s362 = sld [smem:[#allocation2 + $0x13]]
    %v363 = vstv %s362
    %v364 = vmul.f32 %v363, %v360
    %v365 = vmul.f32 %v363, %v361
    %v366 = vadd.f32 %v346, %v364
    %v367 = vadd.f32 %v347, %v365
    %s368 = sld [smem:[#allocation2 + $0x2e]]
    %v369 = vstv %s368
    %v370 = vmul.f32 %v369, %v360
    %v371 = vmul.f32 %v369, %v361
    %v372 = vadd.f32 %v352, %v370
    %v373 = vadd.f32 %v353, %v371
    %374 = vrot.lane.b32.xlu0 %v188, 15
    %v375 = vpop.permute.xlu0 %374
    %376 = vrot.lane.b32.xlu0 %v195, 15
    %v377 = vpop.permute.xlu0 %376
    %vm378 = vcmp.lt.s32.totalorder %v84, 15
    %v379 = vsel %vm378, %v375, %v377
    %v380 = vsel %vm378, %v377, %v375
    %v381 = vmul.f32 %v380, %v132
    %v382 = vmul.f32 %v379, %v133
    %s383 = sld [smem:[#allocation2 + $0x2]]
    %v384 = vstv %s383
    %v385 = vmul.f32 %v384, %v381
    %v386 = vmul.f32 %v384, %v382
    %v387 = vadd.f32 %v366, %v385
    %v388 = vadd.f32 %v367, %v386
    %s389 = sld [smem:[#allocation2 + $0x1d]]
    %v390 = vstv %s389
    %v391 = vmul.f32 %v390, %v381
    %v392 = vmul.f32 %v390, %v382
    %v393 = vadd.f32 %v372, %v391
    %v394 = vadd.f32 %v373, %v392
    %395 = vrot.lane.b32.xlu0 %v236, 15
    %v396 = vpop.permute.xlu0 %395
    %397 = vrot.lane.b32.xlu0 %v243, 15
    %v398 = vpop.permute.xlu0 %397
    %v399 = vsel %vm378, %v396, %v398
    %v400 = vsel %vm378, %v398, %v396
    %v401 = vmul.f32 %v400, %v132
    %v402 = vmul.f32 %v399, %v133
    %s403 = sld [smem:[#allocation2 + $0xb]]
    %v404 = vstv %s403
    %v405 = vmul.f32 %v404, %v401
    %v406 = vmul.f32 %v404, %v402
    %v407 = vadd.f32 %v387, %v405
    %v408 = vadd.f32 %v388, %v406
    %s409 = sld [smem:[#allocation2 + $0x26]]
    %v410 = vstv %s409
    %v411 = vmul.f32 %v410, %v401
    %v412 = vmul.f32 %v410, %v402
    %v413 = vadd.f32 %v393, %v411
    %v414 = vadd.f32 %v394, %v412
    %415 = vrot.lane.b32.xlu0 %v283, 15
    %v416 = vpop.permute.xlu0 %415
    %417 = vrot.lane.b32.xlu0 %v290, 15
    %v418 = vpop.permute.xlu0 %417
    %v419 = vsel %vm378, %v416, %v418
    %v420 = vsel %vm378, %v418, %v416
    %v421 = vmul.f32 %v420, %v132
    %v422 = vmul.f32 %v419, %v133
    %s423 = sld [smem:[#allocation2 + $0x14]]
    %v424 = vstv %s423
    %v425 = vmul.f32 %v424, %v421
    %v426 = vmul.f32 %v424, %v422
    %v427 = vadd.f32 %v407, %v425
    %v428 = vadd.f32 %v408, %v426
    %s429 = sld [smem:[#allocation2 + $0x2f]]
    %v430 = vstv %s429
    %v431 = vmul.f32 %v430, %v421
    %v432 = vmul.f32 %v430, %v422
    %v433 = vadd.f32 %v413, %v431
    %v434 = vadd.f32 %v414, %v432
    %435 = vrot.lane.b32.xlu0 %v188, 1
    %v436 = vpop.permute.xlu0 %435
    %437 = vrot.lane.b32.xlu0 %v195, 1
    %v438 = vpop.permute.xlu0 %437
    %vm439 = vcmp.lt.s32.totalorder %v84, 1
    %v440 = vsel %vm439, %v436, %v438
    %v441 = vsel %vm439, %v438, %v436
    %v442 = vmul.f32 %v441, %v136
    %v443 = vmul.f32 %v440, %v137
    %s444 = sld [smem:[#allocation2 + $0x3]]
    %v445 = vstv %s444
    %v446 = vmul.f32 %v445, %v442
    %v447 = vmul.f32 %v445, %v443
    %v448 = vadd.f32 %v427, %v446
    %v449 = vadd.f32 %v428, %v447
    %s450 = sld [smem:[#allocation2 + $0x1e]]
    %v451 = vstv %s450
    %v452 = vmul.f32 %v451, %v442
    %v453 = vmul.f32 %v451, %v443
    %v454 = vadd.f32 %v433, %v452
    %v455 = vadd.f32 %v434, %v453
    %456 = vrot.lane.b32.xlu0 %v236, 1
    %v457 = vpop.permute.xlu0 %456
    %458 = vrot.lane.b32.xlu0 %v243, 1
    %v459 = vpop.permute.xlu0 %458
    %v460 = vsel %vm439, %v457, %v459
    %v461 = vsel %vm439, %v459, %v457
    %v462 = vmul.f32 %v461, %v136
    %v463 = vmul.f32 %v460, %v137
    %s464 = sld [smem:[#allocation2 + $0xc]]
    %v465 = vstv %s464
    %v466 = vmul.f32 %v465, %v462
    %v467 = vmul.f32 %v465, %v463
    %v468 = vadd.f32 %v448, %v466
    %v469 = vadd.f32 %v449, %v467
    %s470 = sld [smem:[#allocation2 + $0x27]]
    %v471 = vstv %s470
    %v472 = vmul.f32 %v471, %v462
    %v473 = vmul.f32 %v471, %v463
    %v474 = vadd.f32 %v454, %v472
    %v475 = vadd.f32 %v455, %v473
    %476 = vrot.lane.b32.xlu0 %v283, 1
    %v477 = vpop.permute.xlu0 %476
    %478 = vrot.lane.b32.xlu0 %v290, 1
    %v479 = vpop.permute.xlu0 %478
    %v480 = vsel %vm439, %v477, %v479
    %v481 = vsel %vm439, %v479, %v477
    %v482 = vmul.f32 %v481, %v136
    %v483 = vmul.f32 %v480, %v137
    %s484 = sld [smem:[#allocation2 + $0x15]]
    %v485 = vstv %s484
    %v486 = vmul.f32 %v485, %v482
    %v487 = vmul.f32 %v485, %v483
    %v488 = vadd.f32 %v468, %v486
    %v489 = vadd.f32 %v469, %v487
    %s490 = sld [smem:[#allocation2 + $0x30]]
    %v491 = vstv %s490
    %v492 = vmul.f32 %v491, %v482
    %v493 = vmul.f32 %v491, %v483
    %v494 = vadd.f32 %v474, %v492
    %v495 = vadd.f32 %v475, %v493
    %s496 = sld [smem:[#allocation2 + $0x4]]
    %v497 = vstv %s496
    %v498 = vmul.f32 %v497, %v158
    %v499 = vmul.f32 %v497, %v159
    %v502 = vcombine.low %v498, %v499
    %v504 = vunpack.c.l.s4 1966171168
    %v505 = vunpack.c.0.s8 %v504
    %v506 = vlaneseq
    %v507 = vshrl.u32 %v506, 7
    %v508 = vsub.s32 %v505, %v507
    %v509 = vrot.slane %v502, %v508
    %v510 = vcombine.high %v509, %v509
    %v512 = vunpack.c.l.s4 1966171168
    %v513 = vunpack.c.0.s8 %v512
    %v514 = vlaneseq
    %v515 = vshrl.u32 %v514, 7
    %v516 = vsub.s32 %v513, %v515
    %v517 = vrot.slane %v509, %v516
    %v519 = vunpack.c.l.s4 1966171168
    %v520 = vunpack.c.0.s8 %v519
    %v521 = vlaneseq
    %v522 = vshrl.u32 %v521, 7
    %v523 = vsub.s32 %v520, %v522
    %v524 = vrot.slane %v510, %v523
    %v527 = vadd.f32 %v488, %v517
    %v528 = vadd.f32 %v489, %v524
    %s529 = sld [smem:[#allocation2 + $0x1f]]
    %v530 = vstv %s529
    %v531 = vmul.f32 %v530, %v158
    %v532 = vmul.f32 %v530, %v159
    %v535 = vcombine.low %v531, %v532
    %v537 = vunpack.c.l.s4 1966171168
    %v538 = vunpack.c.0.s8 %v537
    %v539 = vlaneseq
    %v540 = vshrl.u32 %v539, 7
    %v541 = vsub.s32 %v538, %v540
    %v542 = vrot.slane %v535, %v541
    %v543 = vcombine.high %v542, %v542
    %v545 = vunpack.c.l.s4 1966171168
    %v546 = vunpack.c.0.s8 %v545
    %v547 = vlaneseq
    %v548 = vshrl.u32 %v547, 7
    %v549 = vsub.s32 %v546, %v548
    %v550 = vrot.slane %v542, %v549
    %v552 = vunpack.c.l.s4 1966171168
    %v553 = vunpack.c.0.s8 %v552
    %v554 = vlaneseq
    %v555 = vshrl.u32 %v554, 7
    %v556 = vsub.s32 %v553, %v555
    %v557 = vrot.slane %v543, %v556
    %v560 = vadd.f32 %v494, %v550
    %v561 = vadd.f32 %v495, %v557
    %s562 = sld [smem:[#allocation2 + $0xd]]
    %v563 = vstv %s562
    %v564 = vmul.f32 %v563, %v160
    %v565 = vmul.f32 %v563, %v162
    %v568 = vcombine.low %v564, %v565
    %v570 = vunpack.c.l.s4 1966171168
    %v571 = vunpack.c.0.s8 %v570
    %v572 = vlaneseq
    %v573 = vshrl.u32 %v572, 7
    %v574 = vsub.s32 %v571, %v573
    %v575 = vrot.slane %v568, %v574
    %v576 = vcombine.high %v575, %v575
    %v578 = vunpack.c.l.s4 1966171168
    %v579 = vunpack.c.0.s8 %v578
    %v580 = vlaneseq
    %v581 = vshrl.u32 %v580, 7
    %v582 = vsub.s32 %v579, %v581
    %v583 = vrot.slane %v575, %v582
    %v585 = vunpack.c.l.s4 1966171168
    %v586 = vunpack.c.0.s8 %v585
    %v587 = vlaneseq
    %v588 = vshrl.u32 %v587, 7
    %v589 = vsub.s32 %v586, %v588
    %v590 = vrot.slane %v576, %v589
    %v593 = vadd.f32 %v527, %v583
    %v594 = vadd.f32 %v528, %v590
    %s595 = sld [smem:[#allocation2 + $0x28]]
    %v596 = vstv %s595
    %v597 = vmul.f32 %v596, %v160
    %v598 = vmul.f32 %v596, %v162
    %v601 = vcombine.low %v597, %v598
    %v603 = vunpack.c.l.s4 1966171168
    %v604 = vunpack.c.0.s8 %v603
    %v605 = vlaneseq
    %v606 = vshrl.u32 %v605, 7
    %v607 = vsub.s32 %v604, %v606
    %v608 = vrot.slane %v601, %v607
    %v609 = vcombine.high %v608, %v608
    %v611 = vunpack.c.l.s4 1966171168
    %v612 = vunpack.c.0.s8 %v611
    %v613 = vlaneseq
    %v614 = vshrl.u32 %v613, 7
    %v615 = vsub.s32 %v612, %v614
    %v616 = vrot.slane %v608, %v615
    %v618 = vunpack.c.l.s4 1966171168
    %v619 = vunpack.c.0.s8 %v618
    %v620 = vlaneseq
    %v621 = vshrl.u32 %v620, 7
    %v622 = vsub.s32 %v619, %v621
    %v623 = vrot.slane %v609, %v622
    %v626 = vadd.f32 %v560, %v616
    %v627 = vadd.f32 %v561, %v623
    %s628 = sld [smem:[#allocation2 + $0x16]]
    %v629 = vstv %s628
    %v630 = vmul.f32 %v629, %v164
    %v631 = vmul.f32 %v629, %v166
    %v634 = vcombine.low %v630, %v631
    %v636 = vunpack.c.l.s4 1966171168
    %v637 = vunpack.c.0.s8 %v636
    %v638 = vlaneseq
    %v639 = vshrl.u32 %v638, 7
    %v640 = vsub.s32 %v637, %v639
    %v641 = vrot.slane %v634, %v640
    %v642 = vcombine.high %v641, %v641
    %v644 = vunpack.c.l.s4 1966171168
    %v645 = vunpack.c.0.s8 %v644
    %v646 = vlaneseq
    %v647 = vshrl.u32 %v646, 7
    %v648 = vsub.s32 %v645, %v647
    %v649 = vrot.slane %v641, %v648
    %v651 = vunpack.c.l.s4 1966171168
    %v652 = vunpack.c.0.s8 %v651
    %v653 = vlaneseq
    %v654 = vshrl.u32 %v653, 7
    %v655 = vsub.s32 %v652, %v654
    %v656 = vrot.slane %v642, %v655
    %v659 = vadd.f32 %v593, %v649
    %v660 = vadd.f32 %v594, %v656
    %s661 = sld [smem:[#allocation2 + $0x31]]
    %v662 = vstv %s661
    %v663 = vmul.f32 %v662, %v164
    %v664 = vmul.f32 %v662, %v166
    %v667 = vcombine.low %v663, %v664
    %v669 = vunpack.c.l.s4 1966171168
    %v670 = vunpack.c.0.s8 %v669
    %v671 = vlaneseq
    %v672 = vshrl.u32 %v671, 7
    %v673 = vsub.s32 %v670, %v672
    %v674 = vrot.slane %v667, %v673
    %v675 = vcombine.high %v674, %v674
    %v677 = vunpack.c.l.s4 1966171168
    %v678 = vunpack.c.0.s8 %v677
    %v679 = vlaneseq
    %v680 = vshrl.u32 %v679, 7
    %v681 = vsub.s32 %v678, %v680
    %v682 = vrot.slane %v674, %v681
    %v684 = vunpack.c.l.s4 1966171168
    %v685 = vunpack.c.0.s8 %v684
    %v686 = vlaneseq
    %v687 = vshrl.u32 %v686, 7
    %v688 = vsub.s32 %v685, %v687
    %v689 = vrot.slane %v675, %v688
    %v692 = vadd.f32 %v626, %v682
    %v693 = vadd.f32 %v627, %v689
    %694 = vrot.lane.b32.xlu0 %v188, 127
    %v695 = vpop.permute.xlu0 %694
    %696 = vrot.lane.b32.xlu0 %v195, 127
    %v697 = vpop.permute.xlu0 %696
    %vm698 = vcmp.lt.s32.totalorder %v84, 127
    %v699 = vsel %vm698, %v695, %v697
    %v700 = vsel %vm698, %v697, %v695
    %v701 = vmul.f32 %v699, %v140
    %v702 = vmul.f32 %v700, %v141
    %s703 = sld [smem:[#allocation2 + $0x5]]
    %v704 = vstv %s703
    %v705 = vmul.f32 %v704, %v701
    %v706 = vmul.f32 %v704, %v702
    %v707 = vadd.f32 %v659, %v705
    %v708 = vadd.f32 %v660, %v706
    %s709 = sld [smem:[#allocation2 + $0x20]]
    %v710 = vstv %s709
    %v711 = vmul.f32 %v710, %v701
    %v712 = vmul.f32 %v710, %v702
    %v713 = vadd.f32 %v692, %v711
    %v714 = vadd.f32 %v693, %v712
    %715 = vrot.lane.b32.xlu0 %v236, 127
    %v716 = vpop.permute.xlu0 %715
    %717 = vrot.lane.b32.xlu0 %v243, 127
    %v718 = vpop.permute.xlu0 %717
    %v719 = vsel %vm698, %v716, %v718
    %v720 = vsel %vm698, %v718, %v716
    %v721 = vmul.f32 %v719, %v140
    %v722 = vmul.f32 %v720, %v141
    %s723 = sld [smem:[#allocation2 + $0xe]]
    %v724 = vstv %s723
    %v725 = vmul.f32 %v724, %v721
    %v726 = vmul.f32 %v724, %v722
    %v727 = vadd.f32 %v707, %v725
    %v728 = vadd.f32 %v708, %v726
    %s729 = sld [smem:[#allocation2 + $0x29]]
    %v730 = vstv %s729
    %v731 = vmul.f32 %v730, %v721
    %v732 = vmul.f32 %v730, %v722
    %v733 = vadd.f32 %v713, %v731
    %v734 = vadd.f32 %v714, %v732
    %735 = vrot.lane.b32.xlu0 %v283, 127
    %v736 = vpop.permute.xlu0 %735
    %737 = vrot.lane.b32.xlu0 %v290, 127
    %v738 = vpop.permute.xlu0 %737
    %v739 = vsel %vm698, %v736, %v738
    %v740 = vsel %vm698, %v738, %v736
    %v741 = vmul.f32 %v739, %v140
    %v742 = vmul.f32 %v740, %v141
    %s743 = sld [smem:[#allocation2 + $0x17]]
    %v744 = vstv %s743
    %v745 = vmul.f32 %v744, %v741
    %v746 = vmul.f32 %v744, %v742
    %v747 = vadd.f32 %v727, %v745
    %v748 = vadd.f32 %v728, %v746
    %s749 = sld [smem:[#allocation2 + $0x32]]
    %v750 = vstv %s749
    %v751 = vmul.f32 %v750, %v741
    %v752 = vmul.f32 %v750, %v742
    %v753 = vadd.f32 %v733, %v751
    %v754 = vadd.f32 %v734, %v752
    %755 = vrot.lane.b32.xlu0 %v188, 113
    %v756 = vpop.permute.xlu0 %755
    %757 = vrot.lane.b32.xlu0 %v195, 113
    %v758 = vpop.permute.xlu0 %757
    %vm759 = vcmp.lt.s32.totalorder %v84, 113
    %v760 = vsel %vm759, %v756, %v758
    %v761 = vsel %vm759, %v758, %v756
    %v762 = vmul.f32 %v760, %v146
    %v763 = vmul.f32 %v761, %v147
    %s764 = sld [smem:[#allocation2 + $0x6]]
    %v765 = vstv %s764
    %v766 = vmul.f32 %v765, %v762
    %v767 = vmul.f32 %v765, %v763
    %v768 = vadd.f32 %v747, %v766
    %v769 = vadd.f32 %v748, %v767
    %s770 = sld [smem:[#allocation2 + $0x21]]
    %v771 = vstv %s770
    %v772 = vmul.f32 %v771, %v762
    %v773 = vmul.f32 %v771, %v763
    %v774 = vadd.f32 %v753, %v772
    %v775 = vadd.f32 %v754, %v773
    %776 = vrot.lane.b32.xlu0 %v236, 113
    %v777 = vpop.permute.xlu0 %776
    %778 = vrot.lane.b32.xlu0 %v243, 113
    %v779 = vpop.permute.xlu0 %778
    %v780 = vsel %vm759, %v777, %v779
    %v781 = vsel %vm759, %v779, %v777
    %v782 = vmul.f32 %v780, %v146
    %v783 = vmul.f32 %v781, %v147
    %s784 = sld [smem:[#allocation2 + $0xf]]
    %v785 = vstv %s784
    %v786 = vmul.f32 %v785, %v782
    %v787 = vmul.f32 %v785, %v783
    %v788 = vadd.f32 %v768, %v786
    %v789 = vadd.f32 %v769, %v787
    %s790 = sld [smem:[#allocation2 + $0x2a]]
    %v791 = vstv %s790
    %v792 = vmul.f32 %v791, %v782
    %v793 = vmul.f32 %v791, %v783
    %v794 = vadd.f32 %v774, %v792
    %v795 = vadd.f32 %v775, %v793
    %796 = vrot.lane.b32.xlu0 %v283, 113
    %v797 = vpop.permute.xlu0 %796
    %798 = vrot.lane.b32.xlu0 %v290, 113
    %v799 = vpop.permute.xlu0 %798
    %v800 = vsel %vm759, %v797, %v799
    %v801 = vsel %vm759, %v799, %v797
    %v802 = vmul.f32 %v800, %v146
    %v803 = vmul.f32 %v801, %v147
    %s804 = sld [smem:[#allocation2 + $0x18]]
    %v805 = vstv %s804
    %v806 = vmul.f32 %v805, %v802
    %v807 = vmul.f32 %v805, %v803
    %v808 = vadd.f32 %v788, %v806
    %v809 = vadd.f32 %v789, %v807
    %s810 = sld [smem:[#allocation2 + $0x33]]
    %v811 = vstv %s810
    %v812 = vmul.f32 %v811, %v802
    %v813 = vmul.f32 %v811, %v803
    %v814 = vadd.f32 %v794, %v812
    %v815 = vadd.f32 %v795, %v813
    %816 = vrot.lane.b32.xlu0 %v188, 112
    %v817 = vpop.permute.xlu0 %816
    %818 = vrot.lane.b32.xlu0 %v195, 112
    %v819 = vpop.permute.xlu0 %818
    %vm820 = vcmp.lt.s32.totalorder %v84, 112
    %v821 = vsel %vm820, %v817, %v819
    %v822 = vsel %vm820, %v819, %v817
    %v823 = vmul.f32 %v821, %v150
    %v824 = vmul.f32 %v822, %v151
    %s825 = sld [smem:[#allocation2 + $0x7]]
    %v826 = vstv %s825
    %v827 = vmul.f32 %v826, %v823
    %v828 = vmul.f32 %v826, %v824
    %v829 = vadd.f32 %v808, %v827
    %v830 = vadd.f32 %v809, %v828
    %s831 = sld [smem:[#allocation2 + $0x22]]
    %v832 = vstv %s831
    %v833 = vmul.f32 %v832, %v823
    %v834 = vmul.f32 %v832, %v824
    %v835 = vadd.f32 %v814, %v833
    %v836 = vadd.f32 %v815, %v834
    %837 = vrot.lane.b32.xlu0 %v236, 112
    %v838 = vpop.permute.xlu0 %837
    %839 = vrot.lane.b32.xlu0 %v243, 112
    %v840 = vpop.permute.xlu0 %839
    %v841 = vsel %vm820, %v838, %v840
    %v842 = vsel %vm820, %v840, %v838
    %v843 = vmul.f32 %v841, %v150
    %v844 = vmul.f32 %v842, %v151
    %s845 = sld [smem:[#allocation2 + $0x10]]
    %v846 = vstv %s845
    %v847 = vmul.f32 %v846, %v843
    %v848 = vmul.f32 %v846, %v844
    %v849 = vadd.f32 %v829, %v847
    %v850 = vadd.f32 %v830, %v848
    %s851 = sld [smem:[#allocation2 + $0x2b]]
    %v852 = vstv %s851
    %v853 = vmul.f32 %v852, %v843
    %v854 = vmul.f32 %v852, %v844
    %v855 = vadd.f32 %v835, %v853
    %v856 = vadd.f32 %v836, %v854
    %857 = vrot.lane.b32.xlu0 %v283, 112
    %v858 = vpop.permute.xlu0 %857
    %859 = vrot.lane.b32.xlu0 %v290, 112
    %v860 = vpop.permute.xlu0 %859
    %v861 = vsel %vm820, %v858, %v860
    %v862 = vsel %vm820, %v860, %v858
    %v863 = vmul.f32 %v861, %v150
    %v864 = vmul.f32 %v862, %v151
    %s865 = sld [smem:[#allocation2 + $0x19]]
    %v866 = vstv %s865
    %v867 = vmul.f32 %v866, %v863
    %v868 = vmul.f32 %v866, %v864
    %v869 = vadd.f32 %v849, %v867
    %v870 = vadd.f32 %v850, %v868
    %s871 = sld [smem:[#allocation2 + $0x34]]
    %v872 = vstv %s871
    %v873 = vmul.f32 %v872, %v863
    %v874 = vmul.f32 %v872, %v864
    %v875 = vadd.f32 %v855, %v873
    %v876 = vadd.f32 %v856, %v874
    %877 = vrot.lane.b32.xlu0 %v188, 111
    %v878 = vpop.permute.xlu0 %877
    %879 = vrot.lane.b32.xlu0 %v195, 111
    %v880 = vpop.permute.xlu0 %879
    %vm881 = vcmp.lt.s32.totalorder %v84, 111
    %v882 = vsel %vm881, %v878, %v880
    %v883 = vsel %vm881, %v880, %v878
    %v884 = vmul.f32 %v882, %v156
    %v885 = vmul.f32 %v883, %v157
    %s886 = sld [smem:[#allocation2 + $0x8]]
    %v887 = vstv %s886
    %v888 = vmul.f32 %v887, %v884
    %v889 = vmul.f32 %v887, %v885
    %v890 = vadd.f32 %v869, %v888
    %v891 = vadd.f32 %v870, %v889
    %s892 = sld [smem:[#allocation2 + $0x23]]
    %v893 = vstv %s892
    %v894 = vmul.f32 %v893, %v884
    %v895 = vmul.f32 %v893, %v885
    %v896 = vadd.f32 %v875, %v894
    %v897 = vadd.f32 %v876, %v895
    %898 = vrot.lane.b32.xlu0 %v236, 111
    %v899 = vpop.permute.xlu0 %898
    %900 = vrot.lane.b32.xlu0 %v243, 111
    %v901 = vpop.permute.xlu0 %900
    %v902 = vsel %vm881, %v899, %v901
    %v903 = vsel %vm881, %v901, %v899
    %v904 = vmul.f32 %v902, %v156
    %v905 = vmul.f32 %v903, %v157
    %s906 = sld [smem:[#allocation2 + $0x11]]
    %v907 = vstv %s906
    %v908 = vmul.f32 %v907, %v904
    %v909 = vmul.f32 %v907, %v905
    %v910 = vadd.f32 %v890, %v908
    %v911 = vadd.f32 %v891, %v909
    %s912 = sld [smem:[#allocation2 + $0x2c]]
    %v913 = vstv %s912
    %v914 = vmul.f32 %v913, %v904
    %v915 = vmul.f32 %v913, %v905
    %v916 = vadd.f32 %v896, %v914
    %v917 = vadd.f32 %v897, %v915
    %918 = vrot.lane.b32.xlu0 %v283, 111
    %v919 = vpop.permute.xlu0 %918
    %920 = vrot.lane.b32.xlu0 %v290, 111
    %v921 = vpop.permute.xlu0 %920
    %v922 = vsel %vm881, %v919, %v921
    %v923 = vsel %vm881, %v921, %v919
    %v924 = vmul.f32 %v922, %v156
    %v925 = vmul.f32 %v923, %v157
    %s926 = sld [smem:[#allocation2 + $0x1a]]
    %v927 = vstv %s926
    %v928 = vmul.f32 %v927, %v924
    %v929 = vmul.f32 %v927, %v925
    %v930 = vadd.f32 %v910, %v928
    %v931 = vadd.f32 %v911, %v929
    %s932 = sld [smem:[#allocation2 + $0x35]]
    %v933 = vstv %s932
    %v934 = vmul.f32 %v933, %v924
    %v935 = vmul.f32 %v933, %v925
    %v936 = vadd.f32 %v916, %v934
    %v937 = vadd.f32 %v917, %v935
    %v938 = vld [vmem:[%s6] sm:$0x3]
    %v940 = vlaneseq
    %v941 = vshrl.u32 %v940, 7
    %v942 = vsub.s32 0, %v941
    %v943 = vrot.slane %v938, %v942
    %v944 = vlaneseq
    %v945 = vshrl.u32 %v944, 7
    %v946 = vsub.s32 1, %v945
    %v947 = vrot.slane %v938, %v946
    %v950 = vmul.f32 %v930, %v943
    %v951 = vmul.f32 %v931, %v947
    %v954 = vcombine.low %v950, %v951
    %v956 = vunpack.c.l.s4 1966171168
    %v957 = vunpack.c.0.s8 %v956
    %v958 = vlaneseq
    %v959 = vshrl.u32 %v958, 7
    %v960 = vsub.s32 %v957, %v959
    %v961 = vrot.slane %v954, %v960
    %v962 = vcombine.high %v961, %v961
    %v964 = vunpack.c.l.s4 1966171168
    %v965 = vunpack.c.0.s8 %v964
    %v966 = vlaneseq
    %v967 = vshrl.u32 %v966, 7
    %v968 = vsub.s32 %v965, %v967
    %v969 = vrot.slane %v961, %v968
    %v971 = vunpack.c.l.s4 1966171168
    %v972 = vunpack.c.0.s8 %v971
    %v973 = vlaneseq
    %v974 = vshrl.u32 %v973, 7
    %v975 = vsub.s32 %v972, %v974
    %v976 = vrot.slane %v962, %v975
    %v979 = vlaneseq
    %vm980 = vcmp.ge.s32.totalorder %v979, 0
    %vm981 = vcmp.lt.s32.totalorder %v979, 256
    %vm982 = vmand %vm980, %vm981
    %983 = vst.msk [vmem:[%s9] ss:$2 sm:$0x3] %vm982, %v969
    %s984 = scalar_lea.vmem %s9, 4
    %985 = vst.msk [vmem:[%s984] ss:$2 sm:$0x3] %vm982, %v976
    %v986 = vmul.f32 %v936, %v943
    %v987 = vmul.f32 %v937, %v947
    %v990 = vcombine.low %v986, %v987
    %v992 = vunpack.c.l.s4 1966171168
    %v993 = vunpack.c.0.s8 %v992
    %v994 = vlaneseq
    %v995 = vshrl.u32 %v994, 7
    %v996 = vsub.s32 %v993, %v995
    %v997 = vrot.slane %v990, %v996
    %v998 = vcombine.high %v997, %v997
    %v1000 = vunpack.c.l.s4 1966171168
    %v1001 = vunpack.c.0.s8 %v1000
    %v1002 = vlaneseq
    %v1003 = vshrl.u32 %v1002, 7
    %v1004 = vsub.s32 %v1001, %v1003
    %v1005 = vrot.slane %v997, %v1004
    %v1007 = vunpack.c.l.s4 1966171168
    %v1008 = vunpack.c.0.s8 %v1007
    %v1009 = vlaneseq
    %v1010 = vshrl.u32 %v1009, 7
    %v1011 = vsub.s32 %v1008, %v1010
    %v1012 = vrot.slane %v998, %v1011
    %s1015 = scalar_lea.vmem %s9, 1
    %1016 = vst.msk [vmem:[%s1015] ss:$2 sm:$0x3] %vm982, %v1005
    %s1017 = scalar_lea.vmem %s9, 5
    %1018 = vst.msk [vmem:[%s1017] ss:$2 sm:$0x3] %vm982, %v1012
    %v1019 = vld [vmem:[%s7] sm:$0x3]
    %v1021 = vlaneseq
    %v1022 = vshrl.u32 %v1021, 7
    %v1023 = vsub.s32 0, %v1022
    %v1024 = vrot.slane %v1019, %v1023
    %v1025 = vlaneseq
    %v1026 = vshrl.u32 %v1025, 7
    %v1027 = vsub.s32 1, %v1026
    %v1028 = vrot.slane %v1019, %v1027
    %v1029 = vcombine.low %v1024, %v1028
    %v1031 = vunpack.c.l.s4 1966171168
    %v1032 = vunpack.c.0.s8 %v1031
    %v1033 = vlaneseq
    %v1034 = vshrl.u32 %v1033, 7
    %v1035 = vsub.s32 %v1032, %v1034
    %v1036 = vrot.slane %v1029, %v1035
    %v1037 = vcombine.high %v1036, %v1036
    %v1039 = vunpack.c.l.s4 1966171168
    %v1040 = vunpack.c.0.s8 %v1039
    %v1041 = vlaneseq
    %v1042 = vshrl.u32 %v1041, 7
    %v1043 = vsub.s32 %v1040, %v1042
    %v1044 = vrot.slane %v1036, %v1043
    %v1046 = vunpack.c.l.s4 1966171168
    %v1047 = vunpack.c.0.s8 %v1046
    %v1048 = vlaneseq
    %v1049 = vshrl.u32 %v1048, 7
    %v1050 = vsub.s32 %v1047, %v1049
    %v1051 = vrot.slane %v1037, %v1050
    %v1054 = vmul.f32 %v158, %v1044
    %v1055 = vmul.f32 %v159, %v1051
    %v1058 = vcombine.low %v1054, %v1055
    %v1060 = vunpack.c.l.s4 1966171168
    %v1061 = vunpack.c.0.s8 %v1060
    %v1062 = vlaneseq
    %v1063 = vshrl.u32 %v1062, 7
    %v1064 = vsub.s32 %v1061, %v1063
    %v1065 = vrot.slane %v1058, %v1064
    %v1066 = vcombine.high %v1065, %v1065
    %v1068 = vunpack.c.l.s4 1966171168
    %v1069 = vunpack.c.0.s8 %v1068
    %v1070 = vlaneseq
    %v1071 = vshrl.u32 %v1070, 7
    %v1072 = vsub.s32 %v1069, %v1071
    %v1073 = vrot.slane %v1065, %v1072
    %v1075 = vunpack.c.l.s4 1966171168
    %v1076 = vunpack.c.0.s8 %v1075
    %v1077 = vlaneseq
    %v1078 = vshrl.u32 %v1077, 7
    %v1079 = vsub.s32 %v1076, %v1078
    %v1080 = vrot.slane %v1066, %v1079
    %v1083 = vmul.f32 %v930, %v1073
    %v1084 = vmul.f32 %v931, %v1080
    %v1085 = vmul.f32 %v936, %v1073
    %v1086 = vmul.f32 %v937, %v1080
    %v1087 = vsub.f32 0.0, %v1085
    %v1088 = vsub.f32 0.0, %v1086
    %v1091 = vcombine.low %v1083, %v1084
    %v1093 = vunpack.c.l.s4 1966171168
    %v1094 = vunpack.c.0.s8 %v1093
    %v1095 = vlaneseq
    %v1096 = vshrl.u32 %v1095, 7
    %v1097 = vsub.s32 %v1094, %v1096
    %v1098 = vrot.slane %v1091, %v1097
    %v1099 = vcombine.high %v1098, %v1098
    %v1101 = vunpack.c.l.s4 1966171168
    %v1102 = vunpack.c.0.s8 %v1101
    %v1103 = vlaneseq
    %v1104 = vshrl.u32 %v1103, 7
    %v1105 = vsub.s32 %v1102, %v1104
    %v1106 = vrot.slane %v1098, %v1105
    %v1108 = vunpack.c.l.s4 1966171168
    %v1109 = vunpack.c.0.s8 %v1108
    %v1110 = vlaneseq
    %v1111 = vshrl.u32 %v1110, 7
    %v1112 = vsub.s32 %v1109, %v1111
    %v1113 = vrot.slane %v1099, %v1112
    %1116 = vst.msk [vmem:[%s11] ss:$2 sm:$0x3] %vm982, %v1106
    %s1117 = scalar_lea.vmem %s11, 4
    %1118 = vst.msk [vmem:[%s1117] ss:$2 sm:$0x3] %vm982, %v1113
    %v1121 = vcombine.low %v1087, %v1088
    %v1123 = vunpack.c.l.s4 1966171168
    %v1124 = vunpack.c.0.s8 %v1123
    %v1125 = vlaneseq
    %v1126 = vshrl.u32 %v1125, 7
    %v1127 = vsub.s32 %v1124, %v1126
    %v1128 = vrot.slane %v1121, %v1127
    %v1129 = vcombine.high %v1128, %v1128
    %v1131 = vunpack.c.l.s4 1966171168
    %v1132 = vunpack.c.0.s8 %v1131
    %v1133 = vlaneseq
    %v1134 = vshrl.u32 %v1133, 7
    %v1135 = vsub.s32 %v1132, %v1134
    %v1136 = vrot.slane %v1128, %v1135
    %v1138 = vunpack.c.l.s4 1966171168
    %v1139 = vunpack.c.0.s8 %v1138
    %v1140 = vlaneseq
    %v1141 = vshrl.u32 %v1140, 7
    %v1142 = vsub.s32 %v1139, %v1141
    %v1143 = vrot.slane %v1129, %v1142
    %s1146 = scalar_lea.vmem %s11, 1
    %1147 = vst.msk [vmem:[%s1146] ss:$2 sm:$0x3] %vm982, %v1136
    %s1148 = scalar_lea.vmem %s11, 5
    %1149 = vst.msk [vmem:[%s1148] ss:$2 sm:$0x3] %vm982, %v1143
    %s1150 = sld [smem:[#allocation7]]
    %v1151 = vstv %s1150
    %s1152 = sld [smem:[#allocation7 + $0x1]]
    %v1153 = vstv %s1152
    %s1154 = sld [smem:[#allocation6]]
    %v1155 = vstv %s1154
    %v1156 = vmul.f32 %v1155, %v205
    %v1157 = vmul.f32 %v1155, %v206
    %v1158 = vadd.f32 %v1151, %v1156
    %v1159 = vadd.f32 %v1151, %v1157
    %s1160 = sld [smem:[#allocation6 + $0x1b]]
    %v1161 = vstv %s1160
    %v1162 = vmul.f32 %v1161, %v205
    %v1163 = vmul.f32 %v1161, %v206
    %v1164 = vadd.f32 %v1153, %v1162
    %v1165 = vadd.f32 %v1153, %v1163
    %1166 = vrot.lane.b32.xlu0 %v1083, 17
    %v1167 = vpop.permute.xlu0 %1166
    %1168 = vrot.lane.b32.xlu0 %v1084, 17
    %v1169 = vpop.permute.xlu0 %1168
    %v1170 = vsel %vm202, %v1167, %v1169
    %v1171 = vsel %vm202, %v1169, %v1167
    %v1172 = vmul.f32 %v1171, %v122
    %v1173 = vmul.f32 %v1170, %v123
    %s1174 = sld [smem:[#allocation6 + $0x9]]
    %v1175 = vstv %s1174
    %v1176 = vmul.f32 %v1175, %v1172
    %v1177 = vmul.f32 %v1175, %v1173
    %v1178 = vadd.f32 %v1158, %v1176
    %v1179 = vadd.f32 %v1159, %v1177
    %s1180 = sld [smem:[#allocation6 + $0x24]]
    %v1181 = vstv %s1180
    %v1182 = vmul.f32 %v1181, %v1172
    %v1183 = vmul.f32 %v1181, %v1173
    %v1184 = vadd.f32 %v1164, %v1182
    %v1185 = vadd.f32 %v1165, %v1183
    %1186 = vrot.lane.b32.xlu0 %v1087, 17
    %v1187 = vpop.permute.xlu0 %1186
    %1188 = vrot.lane.b32.xlu0 %v1088, 17
    %v1189 = vpop.permute.xlu0 %1188
    %v1190 = vsel %vm202, %v1187, %v1189
    %v1191 = vsel %vm202, %v1189, %v1187
    %v1192 = vmul.f32 %v1191, %v122
    %v1193 = vmul.f32 %v1190, %v123
    %s1194 = sld [smem:[#allocation6 + $0x12]]
    %v1195 = vstv %s1194
    %v1196 = vmul.f32 %v1195, %v1192
    %v1197 = vmul.f32 %v1195, %v1193
    %v1198 = vadd.f32 %v1178, %v1196
    %v1199 = vadd.f32 %v1179, %v1197
    %s1200 = sld [smem:[#allocation6 + $0x2d]]
    %v1201 = vstv %s1200
    %v1202 = vmul.f32 %v1201, %v1192
    %v1203 = vmul.f32 %v1201, %v1193
    %v1204 = vadd.f32 %v1184, %v1202
    %v1205 = vadd.f32 %v1185, %v1203
    %s1206 = sld [smem:[#allocation6 + $0x1]]
    %v1207 = vstv %s1206
    %v1208 = vmul.f32 %v1207, %v320
    %v1209 = vmul.f32 %v1207, %v321
    %v1210 = vadd.f32 %v1198, %v1208
    %v1211 = vadd.f32 %v1199, %v1209
    %s1212 = sld [smem:[#allocation6 + $0x1c]]
    %v1213 = vstv %s1212
    %v1214 = vmul.f32 %v1213, %v320
    %v1215 = vmul.f32 %v1213, %v321
    %v1216 = vadd.f32 %v1204, %v1214
    %v1217 = vadd.f32 %v1205, %v1215
    %1218 = vrot.lane.b32.xlu0 %v1083, 16
    %v1219 = vpop.permute.xlu0 %1218
    %1220 = vrot.lane.b32.xlu0 %v1084, 16
    %v1221 = vpop.permute.xlu0 %1220
    %v1222 = vsel %vm317, %v1219, %v1221
    %v1223 = vsel %vm317, %v1221, %v1219
    %v1224 = vmul.f32 %v1223, %v126
    %v1225 = vmul.f32 %v1222, %v127
    %s1226 = sld [smem:[#allocation6 + $0xa]]
    %v1227 = vstv %s1226
    %v1228 = vmul.f32 %v1227, %v1224
    %v1229 = vmul.f32 %v1227, %v1225
    %v1230 = vadd.f32 %v1210, %v1228
    %v1231 = vadd.f32 %v1211, %v1229
    %s1232 = sld [smem:[#allocation6 + $0x25]]
    %v1233 = vstv %s1232
    %v1234 = vmul.f32 %v1233, %v1224
    %v1235 = vmul.f32 %v1233, %v1225
    %v1236 = vadd.f32 %v1216, %v1234
    %v1237 = vadd.f32 %v1217, %v1235
    %1238 = vrot.lane.b32.xlu0 %v1087, 16
    %v1239 = vpop.permute.xlu0 %1238
    %1240 = vrot.lane.b32.xlu0 %v1088, 16
    %v1241 = vpop.permute.xlu0 %1240
    %v1242 = vsel %vm317, %v1239, %v1241
    %v1243 = vsel %vm317, %v1241, %v1239
    %v1244 = vmul.f32 %v1243, %v126
    %v1245 = vmul.f32 %v1242, %v127
    %s1246 = sld [smem:[#allocation6 + $0x13]]
    %v1247 = vstv %s1246
    %v1248 = vmul.f32 %v1247, %v1244
    %v1249 = vmul.f32 %v1247, %v1245
    %v1250 = vadd.f32 %v1230, %v1248
    %v1251 = vadd.f32 %v1231, %v1249
    %s1252 = sld [smem:[#allocation6 + $0x2e]]
    %v1253 = vstv %s1252
    %v1254 = vmul.f32 %v1253, %v1244
    %v1255 = vmul.f32 %v1253, %v1245
    %v1256 = vadd.f32 %v1236, %v1254
    %v1257 = vadd.f32 %v1237, %v1255
    %s1258 = sld [smem:[#allocation6 + $0x2]]
    %v1259 = vstv %s1258
    %v1260 = vmul.f32 %v1259, %v381
    %v1261 = vmul.f32 %v1259, %v382
    %v1262 = vadd.f32 %v1250, %v1260
    %v1263 = vadd.f32 %v1251, %v1261
    %s1264 = sld [smem:[#allocation6 + $0x1d]]
    %v1265 = vstv %s1264
    %v1266 = vmul.f32 %v1265, %v381
    %v1267 = vmul.f32 %v1265, %v382
    %v1268 = vadd.f32 %v1256, %v1266
    %v1269 = vadd.f32 %v1257, %v1267
    %1270 = vrot.lane.b32.xlu0 %v1083, 15
    %v1271 = vpop.permute.xlu0 %1270
    %1272 = vrot.lane.b32.xlu0 %v1084, 15
    %v1273 = vpop.permute.xlu0 %1272
    %v1274 = vsel %vm378, %v1271, %v1273
    %v1275 = vsel %vm378, %v1273, %v1271
    %v1276 = vmul.f32 %v1275, %v132
    %v1277 = vmul.f32 %v1274, %v133
    %s1278 = sld [smem:[#allocation6 + $0xb]]
    %v1279 = vstv %s1278
    %v1280 = vmul.f32 %v1279, %v1276
    %v1281 = vmul.f32 %v1279, %v1277
    %v1282 = vadd.f32 %v1262, %v1280
    %v1283 = vadd.f32 %v1263, %v1281
    %s1284 = sld [smem:[#allocation6 + $0x26]]
    %v1285 = vstv %s1284
    %v1286 = vmul.f32 %v1285, %v1276
    %v1287 = vmul.f32 %v1285, %v1277
    %v1288 = vadd.f32 %v1268, %v1286
    %v1289 = vadd.f32 %v1269, %v1287
    %1290 = vrot.lane.b32.xlu0 %v1087, 15
    %v1291 = vpop.permute.xlu0 %1290
    %1292 = vrot.lane.b32.xlu0 %v1088, 15
    %v1293 = vpop.permute.xlu0 %1292
    %v1294 = vsel %vm378, %v1291, %v1293
    %v1295 = vsel %vm378, %v1293, %v1291
    %v1296 = vmul.f32 %v1295, %v132
    %v1297 = vmul.f32 %v1294, %v133
    %s1298 = sld [smem:[#allocation6 + $0x14]]
    %v1299 = vstv %s1298
    %v1300 = vmul.f32 %v1299, %v1296
    %v1301 = vmul.f32 %v1299, %v1297
    %v1302 = vadd.f32 %v1282, %v1300
    %v1303 = vadd.f32 %v1283, %v1301
    %s1304 = sld [smem:[#allocation6 + $0x2f]]
    %v1305 = vstv %s1304
    %v1306 = vmul.f32 %v1305, %v1296
    %v1307 = vmul.f32 %v1305, %v1297
    %v1308 = vadd.f32 %v1288, %v1306
    %v1309 = vadd.f32 %v1289, %v1307
    %s1310 = sld [smem:[#allocation6 + $0x3]]
    %v1311 = vstv %s1310
    %v1312 = vmul.f32 %v1311, %v442
    %v1313 = vmul.f32 %v1311, %v443
    %v1314 = vadd.f32 %v1302, %v1312
    %v1315 = vadd.f32 %v1303, %v1313
    %s1316 = sld [smem:[#allocation6 + $0x1e]]
    %v1317 = vstv %s1316
    %v1318 = vmul.f32 %v1317, %v442
    %v1319 = vmul.f32 %v1317, %v443
    %v1320 = vadd.f32 %v1308, %v1318
    %v1321 = vadd.f32 %v1309, %v1319
    %1322 = vrot.lane.b32.xlu0 %v1083, 1
    %v1323 = vpop.permute.xlu0 %1322
    %1324 = vrot.lane.b32.xlu0 %v1084, 1
    %v1325 = vpop.permute.xlu0 %1324
    %v1326 = vsel %vm439, %v1323, %v1325
    %v1327 = vsel %vm439, %v1325, %v1323
    %v1328 = vmul.f32 %v1327, %v136
    %v1329 = vmul.f32 %v1326, %v137
    %s1330 = sld [smem:[#allocation6 + $0xc]]
    %v1331 = vstv %s1330
    %v1332 = vmul.f32 %v1331, %v1328
    %v1333 = vmul.f32 %v1331, %v1329
    %v1334 = vadd.f32 %v1314, %v1332
    %v1335 = vadd.f32 %v1315, %v1333
    %s1336 = sld [smem:[#allocation6 + $0x27]]
    %v1337 = vstv %s1336
    %v1338 = vmul.f32 %v1337, %v1328
    %v1339 = vmul.f32 %v1337, %v1329
    %v1340 = vadd.f32 %v1320, %v1338
    %v1341 = vadd.f32 %v1321, %v1339
    %1342 = vrot.lane.b32.xlu0 %v1087, 1
    %v1343 = vpop.permute.xlu0 %1342
    %1344 = vrot.lane.b32.xlu0 %v1088, 1
    %v1345 = vpop.permute.xlu0 %1344
    %v1346 = vsel %vm439, %v1343, %v1345
    %v1347 = vsel %vm439, %v1345, %v1343
    %v1348 = vmul.f32 %v1347, %v136
    %v1349 = vmul.f32 %v1346, %v137
    %s1350 = sld [smem:[#allocation6 + $0x15]]
    %v1351 = vstv %s1350
    %v1352 = vmul.f32 %v1351, %v1348
    %v1353 = vmul.f32 %v1351, %v1349
    %v1354 = vadd.f32 %v1334, %v1352
    %v1355 = vadd.f32 %v1335, %v1353
    %s1356 = sld [smem:[#allocation6 + $0x30]]
    %v1357 = vstv %s1356
    %v1358 = vmul.f32 %v1357, %v1348
    %v1359 = vmul.f32 %v1357, %v1349
    %v1360 = vadd.f32 %v1340, %v1358
    %v1361 = vadd.f32 %v1341, %v1359
    %s1362 = sld [smem:[#allocation6 + $0x4]]
    %v1363 = vstv %s1362
    %v1364 = vmul.f32 %v1363, %v158
    %v1365 = vmul.f32 %v1363, %v159
    %v1368 = vcombine.low %v1364, %v1365
    %v1370 = vunpack.c.l.s4 1966171168
    %v1371 = vunpack.c.0.s8 %v1370
    %v1372 = vlaneseq
    %v1373 = vshrl.u32 %v1372, 7
    %v1374 = vsub.s32 %v1371, %v1373
    %v1375 = vrot.slane %v1368, %v1374
    %v1376 = vcombine.high %v1375, %v1375
    %v1378 = vunpack.c.l.s4 1966171168
    %v1379 = vunpack.c.0.s8 %v1378
    %v1380 = vlaneseq
    %v1381 = vshrl.u32 %v1380, 7
    %v1382 = vsub.s32 %v1379, %v1381
    %v1383 = vrot.slane %v1375, %v1382
    %v1385 = vunpack.c.l.s4 1966171168
    %v1386 = vunpack.c.0.s8 %v1385
    %v1387 = vlaneseq
    %v1388 = vshrl.u32 %v1387, 7
    %v1389 = vsub.s32 %v1386, %v1388
    %v1390 = vrot.slane %v1376, %v1389
    %v1393 = vadd.f32 %v1354, %v1383
    %v1394 = vadd.f32 %v1355, %v1390
    %s1395 = sld [smem:[#allocation6 + $0x1f]]
    %v1396 = vstv %s1395
    %v1397 = vmul.f32 %v1396, %v158
    %v1398 = vmul.f32 %v1396, %v159
    %v1401 = vcombine.low %v1397, %v1398
    %v1403 = vunpack.c.l.s4 1966171168
    %v1404 = vunpack.c.0.s8 %v1403
    %v1405 = vlaneseq
    %v1406 = vshrl.u32 %v1405, 7
    %v1407 = vsub.s32 %v1404, %v1406
    %v1408 = vrot.slane %v1401, %v1407
    %v1409 = vcombine.high %v1408, %v1408
    %v1411 = vunpack.c.l.s4 1966171168
    %v1412 = vunpack.c.0.s8 %v1411
    %v1413 = vlaneseq
    %v1414 = vshrl.u32 %v1413, 7
    %v1415 = vsub.s32 %v1412, %v1414
    %v1416 = vrot.slane %v1408, %v1415
    %v1418 = vunpack.c.l.s4 1966171168
    %v1419 = vunpack.c.0.s8 %v1418
    %v1420 = vlaneseq
    %v1421 = vshrl.u32 %v1420, 7
    %v1422 = vsub.s32 %v1419, %v1421
    %v1423 = vrot.slane %v1409, %v1422
    %v1426 = vadd.f32 %v1360, %v1416
    %v1427 = vadd.f32 %v1361, %v1423
    %s1428 = sld [smem:[#allocation6 + $0xd]]
    %v1429 = vstv %s1428
    %v1430 = vmul.f32 %v1429, %v1083
    %v1431 = vmul.f32 %v1429, %v1084
    %v1432 = vadd.f32 %v1393, %v1430
    %v1433 = vadd.f32 %v1394, %v1431
    %s1434 = sld [smem:[#allocation6 + $0x28]]
    %v1435 = vstv %s1434
    %v1436 = vmul.f32 %v1435, %v1083
    %v1437 = vmul.f32 %v1435, %v1084
    %v1438 = vadd.f32 %v1426, %v1436
    %v1439 = vadd.f32 %v1427, %v1437
    %s1440 = sld [smem:[#allocation6 + $0x16]]
    %v1441 = vstv %s1440
    %v1442 = vmul.f32 %v1441, %v1087
    %v1443 = vmul.f32 %v1441, %v1088
    %v1444 = vadd.f32 %v1432, %v1442
    %v1445 = vadd.f32 %v1433, %v1443
    %s1446 = sld [smem:[#allocation6 + $0x31]]
    %v1447 = vstv %s1446
    %v1448 = vmul.f32 %v1447, %v1087
    %v1449 = vmul.f32 %v1447, %v1088
    %v1450 = vadd.f32 %v1438, %v1448
    %v1451 = vadd.f32 %v1439, %v1449
    %s1452 = sld [smem:[#allocation6 + $0x5]]
    %v1453 = vstv %s1452
    %v1454 = vmul.f32 %v1453, %v701
    %v1455 = vmul.f32 %v1453, %v702
    %v1456 = vadd.f32 %v1444, %v1454
    %v1457 = vadd.f32 %v1445, %v1455
    %s1458 = sld [smem:[#allocation6 + $0x20]]
    %v1459 = vstv %s1458
    %v1460 = vmul.f32 %v1459, %v701
    %v1461 = vmul.f32 %v1459, %v702
    %v1462 = vadd.f32 %v1450, %v1460
    %v1463 = vadd.f32 %v1451, %v1461
    %1464 = vrot.lane.b32.xlu0 %v1083, 127
    %v1465 = vpop.permute.xlu0 %1464
    %1466 = vrot.lane.b32.xlu0 %v1084, 127
    %v1467 = vpop.permute.xlu0 %1466
    %v1468 = vsel %vm698, %v1465, %v1467
    %v1469 = vsel %vm698, %v1467, %v1465
    %v1470 = vmul.f32 %v1468, %v140
    %v1471 = vmul.f32 %v1469, %v141
    %s1472 = sld [smem:[#allocation6 + $0xe]]
    %v1473 = vstv %s1472
    %v1474 = vmul.f32 %v1473, %v1470
    %v1475 = vmul.f32 %v1473, %v1471
    %v1476 = vadd.f32 %v1456, %v1474
    %v1477 = vadd.f32 %v1457, %v1475
    %s1478 = sld [smem:[#allocation6 + $0x29]]
    %v1479 = vstv %s1478
    %v1480 = vmul.f32 %v1479, %v1470
    %v1481 = vmul.f32 %v1479, %v1471
    %v1482 = vadd.f32 %v1462, %v1480
    %v1483 = vadd.f32 %v1463, %v1481
    %1484 = vrot.lane.b32.xlu0 %v1087, 127
    %v1485 = vpop.permute.xlu0 %1484
    %1486 = vrot.lane.b32.xlu0 %v1088, 127
    %v1487 = vpop.permute.xlu0 %1486
    %v1488 = vsel %vm698, %v1485, %v1487
    %v1489 = vsel %vm698, %v1487, %v1485
    %v1490 = vmul.f32 %v1488, %v140
    %v1491 = vmul.f32 %v1489, %v141
    %s1492 = sld [smem:[#allocation6 + $0x17]]
    %v1493 = vstv %s1492
    %v1494 = vmul.f32 %v1493, %v1490
    %v1495 = vmul.f32 %v1493, %v1491
    %v1496 = vadd.f32 %v1476, %v1494
    %v1497 = vadd.f32 %v1477, %v1495
    %s1498 = sld [smem:[#allocation6 + $0x32]]
    %v1499 = vstv %s1498
    %v1500 = vmul.f32 %v1499, %v1490
    %v1501 = vmul.f32 %v1499, %v1491
    %v1502 = vadd.f32 %v1482, %v1500
    %v1503 = vadd.f32 %v1483, %v1501
    %s1504 = sld [smem:[#allocation6 + $0x6]]
    %v1505 = vstv %s1504
    %v1506 = vmul.f32 %v1505, %v762
    %v1507 = vmul.f32 %v1505, %v763
    %v1508 = vadd.f32 %v1496, %v1506
    %v1509 = vadd.f32 %v1497, %v1507
    %s1510 = sld [smem:[#allocation6 + $0x21]]
    %v1511 = vstv %s1510
    %v1512 = vmul.f32 %v1511, %v762
    %v1513 = vmul.f32 %v1511, %v763
    %v1514 = vadd.f32 %v1502, %v1512
    %v1515 = vadd.f32 %v1503, %v1513
    %1516 = vrot.lane.b32.xlu0 %v1083, 113
    %v1517 = vpop.permute.xlu0 %1516
    %1518 = vrot.lane.b32.xlu0 %v1084, 113
    %v1519 = vpop.permute.xlu0 %1518
    %v1520 = vsel %vm759, %v1517, %v1519
    %v1521 = vsel %vm759, %v1519, %v1517
    %v1522 = vmul.f32 %v1520, %v146
    %v1523 = vmul.f32 %v1521, %v147
    %s1524 = sld [smem:[#allocation6 + $0xf]]
    %v1525 = vstv %s1524
    %v1526 = vmul.f32 %v1525, %v1522
    %v1527 = vmul.f32 %v1525, %v1523
    %v1528 = vadd.f32 %v1508, %v1526
    %v1529 = vadd.f32 %v1509, %v1527
    %s1530 = sld [smem:[#allocation6 + $0x2a]]
    %v1531 = vstv %s1530
    %v1532 = vmul.f32 %v1531, %v1522
    %v1533 = vmul.f32 %v1531, %v1523
    %v1534 = vadd.f32 %v1514, %v1532
    %v1535 = vadd.f32 %v1515, %v1533
    %1536 = vrot.lane.b32.xlu0 %v1087, 113
    %v1537 = vpop.permute.xlu0 %1536
    %1538 = vrot.lane.b32.xlu0 %v1088, 113
    %v1539 = vpop.permute.xlu0 %1538
    %v1540 = vsel %vm759, %v1537, %v1539
    %v1541 = vsel %vm759, %v1539, %v1537
    %v1542 = vmul.f32 %v1540, %v146
    %v1543 = vmul.f32 %v1541, %v147
    %s1544 = sld [smem:[#allocation6 + $0x18]]
    %v1545 = vstv %s1544
    %v1546 = vmul.f32 %v1545, %v1542
    %v1547 = vmul.f32 %v1545, %v1543
    %v1548 = vadd.f32 %v1528, %v1546
    %v1549 = vadd.f32 %v1529, %v1547
    %s1550 = sld [smem:[#allocation6 + $0x33]]
    %v1551 = vstv %s1550
    %v1552 = vmul.f32 %v1551, %v1542
    %v1553 = vmul.f32 %v1551, %v1543
    %v1554 = vadd.f32 %v1534, %v1552
    %v1555 = vadd.f32 %v1535, %v1553
    %s1556 = sld [smem:[#allocation6 + $0x7]]
    %v1557 = vstv %s1556
    %v1558 = vmul.f32 %v1557, %v823
    %v1559 = vmul.f32 %v1557, %v824
    %v1560 = vadd.f32 %v1548, %v1558
    %v1561 = vadd.f32 %v1549, %v1559
    %s1562 = sld [smem:[#allocation6 + $0x22]]
    %v1563 = vstv %s1562
    %v1564 = vmul.f32 %v1563, %v823
    %v1565 = vmul.f32 %v1563, %v824
    %v1566 = vadd.f32 %v1554, %v1564
    %v1567 = vadd.f32 %v1555, %v1565
    %1568 = vrot.lane.b32.xlu0 %v1083, 112
    %v1569 = vpop.permute.xlu0 %1568
    %1570 = vrot.lane.b32.xlu0 %v1084, 112
    %v1571 = vpop.permute.xlu0 %1570
    %v1572 = vsel %vm820, %v1569, %v1571
    %v1573 = vsel %vm820, %v1571, %v1569
    %v1574 = vmul.f32 %v1572, %v150
    %v1575 = vmul.f32 %v1573, %v151
    %s1576 = sld [smem:[#allocation6 + $0x10]]
    %v1577 = vstv %s1576
    %v1578 = vmul.f32 %v1577, %v1574
    %v1579 = vmul.f32 %v1577, %v1575
    %v1580 = vadd.f32 %v1560, %v1578
    %v1581 = vadd.f32 %v1561, %v1579
    %s1582 = sld [smem:[#allocation6 + $0x2b]]
    %v1583 = vstv %s1582
    %v1584 = vmul.f32 %v1583, %v1574
    %v1585 = vmul.f32 %v1583, %v1575
    %v1586 = vadd.f32 %v1566, %v1584
    %v1587 = vadd.f32 %v1567, %v1585
    %1588 = vrot.lane.b32.xlu0 %v1087, 112
    %v1589 = vpop.permute.xlu0 %1588
    %1590 = vrot.lane.b32.xlu0 %v1088, 112
    %v1591 = vpop.permute.xlu0 %1590
    %v1592 = vsel %vm820, %v1589, %v1591
    %v1593 = vsel %vm820, %v1591, %v1589
    %v1594 = vmul.f32 %v1592, %v150
    %v1595 = vmul.f32 %v1593, %v151
    %s1596 = sld [smem:[#allocation6 + $0x19]]
    %v1597 = vstv %s1596
    %v1598 = vmul.f32 %v1597, %v1594
    %v1599 = vmul.f32 %v1597, %v1595
    %v1600 = vadd.f32 %v1580, %v1598
    %v1601 = vadd.f32 %v1581, %v1599
    %s1602 = sld [smem:[#allocation6 + $0x34]]
    %v1603 = vstv %s1602
    %v1604 = vmul.f32 %v1603, %v1594
    %v1605 = vmul.f32 %v1603, %v1595
    %v1606 = vadd.f32 %v1586, %v1604
    %v1607 = vadd.f32 %v1587, %v1605
    %s1608 = sld [smem:[#allocation6 + $0x8]]
    %v1609 = vstv %s1608
    %v1610 = vmul.f32 %v1609, %v884
    %v1611 = vmul.f32 %v1609, %v885
    %v1612 = vadd.f32 %v1600, %v1610
    %v1613 = vadd.f32 %v1601, %v1611
    %s1614 = sld [smem:[#allocation6 + $0x23]]
    %v1615 = vstv %s1614
    %v1616 = vmul.f32 %v1615, %v884
    %v1617 = vmul.f32 %v1615, %v885
    %v1618 = vadd.f32 %v1606, %v1616
    %v1619 = vadd.f32 %v1607, %v1617
    %1620 = vrot.lane.b32.xlu0 %v1083, 111
    %v1621 = vpop.permute.xlu0 %1620
    %1622 = vrot.lane.b32.xlu0 %v1084, 111
    %v1623 = vpop.permute.xlu0 %1622
    %v1624 = vsel %vm881, %v1621, %v1623
    %v1625 = vsel %vm881, %v1623, %v1621
    %v1626 = vmul.f32 %v1624, %v156
    %v1627 = vmul.f32 %v1625, %v157
    %s1628 = sld [smem:[#allocation6 + $0x11]]
    %v1629 = vstv %s1628
    %v1630 = vmul.f32 %v1629, %v1626
    %v1631 = vmul.f32 %v1629, %v1627
    %v1632 = vadd.f32 %v1612, %v1630
    %v1633 = vadd.f32 %v1613, %v1631
    %s1634 = sld [smem:[#allocation6 + $0x2c]]
    %v1635 = vstv %s1634
    %v1636 = vmul.f32 %v1635, %v1626
    %v1637 = vmul.f32 %v1635, %v1627
    %v1638 = vadd.f32 %v1618, %v1636
    %v1639 = vadd.f32 %v1619, %v1637
    %1640 = vrot.lane.b32.xlu0 %v1087, 111
    %v1641 = vpop.permute.xlu0 %1640
    %1642 = vrot.lane.b32.xlu0 %v1088, 111
    %v1643 = vpop.permute.xlu0 %1642
    %v1644 = vsel %vm881, %v1641, %v1643
    %v1645 = vsel %vm881, %v1643, %v1641
    %v1646 = vmul.f32 %v1644, %v156
    %v1647 = vmul.f32 %v1645, %v157
    %s1648 = sld [smem:[#allocation6 + $0x1a]]
    %v1649 = vstv %s1648
    %v1650 = vmul.f32 %v1649, %v1646
    %v1651 = vmul.f32 %v1649, %v1647
    %v1652 = vadd.f32 %v1632, %v1650
    %v1653 = vadd.f32 %v1633, %v1651
    %s1654 = sld [smem:[#allocation6 + $0x35]]
    %v1655 = vstv %s1654
    %v1656 = vmul.f32 %v1655, %v1646
    %v1657 = vmul.f32 %v1655, %v1647
    %v1658 = vadd.f32 %v1638, %v1656
    %v1659 = vadd.f32 %v1639, %v1657
    %v1660 = vld [vmem:[%s8] sm:$0x3]
    %v1662 = vlaneseq
    %v1663 = vshrl.u32 %v1662, 7
    %v1664 = vsub.s32 0, %v1663
    %v1665 = vrot.slane %v1660, %v1664
    %v1666 = vlaneseq
    %v1667 = vshrl.u32 %v1666, 7
    %v1668 = vsub.s32 1, %v1667
    %v1669 = vrot.slane %v1660, %v1668
    %v1672 = vmul.f32 %v1652, %v1665
    %v1673 = vmul.f32 %v1653, %v1669
    %v1676 = vcombine.low %v1672, %v1673
    %v1678 = vunpack.c.l.s4 1966171168
    %v1679 = vunpack.c.0.s8 %v1678
    %v1680 = vlaneseq
    %v1681 = vshrl.u32 %v1680, 7
    %v1682 = vsub.s32 %v1679, %v1681
    %v1683 = vrot.slane %v1676, %v1682
    %v1684 = vcombine.high %v1683, %v1683
    %v1686 = vunpack.c.l.s4 1966171168
    %v1687 = vunpack.c.0.s8 %v1686
    %v1688 = vlaneseq
    %v1689 = vshrl.u32 %v1688, 7
    %v1690 = vsub.s32 %v1687, %v1689
    %v1691 = vrot.slane %v1683, %v1690
    %v1693 = vunpack.c.l.s4 1966171168
    %v1694 = vunpack.c.0.s8 %v1693
    %v1695 = vlaneseq
    %v1696 = vshrl.u32 %v1695, 7
    %v1697 = vsub.s32 %v1694, %v1696
    %v1698 = vrot.slane %v1684, %v1697
    %1701 = vst.msk [vmem:[%s10] ss:$2 sm:$0x3] %vm982, %v1691
    %s1702 = scalar_lea.vmem %s10, 4
    %1703 = vst.msk [vmem:[%s1702] ss:$2 sm:$0x3] %vm982, %v1698
    %v1704 = vmul.f32 %v1658, %v1665
    %v1705 = vmul.f32 %v1659, %v1669
    %v1708 = vcombine.low %v1704, %v1705
    %v1710 = vunpack.c.l.s4 1966171168
    %v1711 = vunpack.c.0.s8 %v1710
    %v1712 = vlaneseq
    %v1713 = vshrl.u32 %v1712, 7
    %v1714 = vsub.s32 %v1711, %v1713
    %v1715 = vrot.slane %v1708, %v1714
    %v1716 = vcombine.high %v1715, %v1715
    %v1718 = vunpack.c.l.s4 1966171168
    %v1719 = vunpack.c.0.s8 %v1718
    %v1720 = vlaneseq
    %v1721 = vshrl.u32 %v1720, 7
    %v1722 = vsub.s32 %v1719, %v1721
    %v1723 = vrot.slane %v1715, %v1722
    %v1725 = vunpack.c.l.s4 1966171168
    %v1726 = vunpack.c.0.s8 %v1725
    %v1727 = vlaneseq
    %v1728 = vshrl.u32 %v1727, 7
    %v1729 = vsub.s32 %v1726, %v1728
    %v1730 = vrot.slane %v1716, %v1729
    %s1733 = scalar_lea.vmem %s10, 1
    %1734 = vst.msk [vmem:[%s1733] ss:$2 sm:$0x3] %vm982, %v1723
    %s1735 = scalar_lea.vmem %s10, 5
    %1736 = vst.msk [vmem:[%s1735] ss:$2 sm:$0x3] %vm982, %v1730
    // Predicated region
    $region54: #{_forward_impl.1} parent=1 // pred_check
      _
    $region55: #{_forward_impl.1} parent=1 // pred_check_branch
      %1738 = sbr.rel (0) target = $region57
    $region56: #{_forward_impl.1} parent=1 // pred_region
      _
    $region57: #{_forward_impl.1} parent=1 // pred_fallthru
      _
    // Predicated region
    $region58: #{_forward_impl.1} parent=1 // pred_check
      _
    $region59: #{_forward_impl.1} parent=1 // pred_check_branch
      %1740 = sbr.rel (0) target = $region61
    $region60: #{_forward_impl.1} parent=1 // pred_region
      _
    $region61: #{_forward_impl.1} parent=1 // pred_fallthru
      _
    // Predicated region
    $region62: #{_forward_impl.1} parent=1 // pred_check
      _
    $region63: #{_forward_impl.1} parent=1 // pred_check_branch
      %1742 = sbr.rel (0) target = $region65
    $region64: #{_forward_impl.1} parent=1 // pred_region
      _
    $region65: #{_forward_impl.1} parent=1 // pred_fallthru
      _
    // Predicated region
    $region66: #{_forward_impl.1} parent=1 // pred_check
      _
    $region67: #{_forward_impl.1} parent=1 // pred_check_branch
      %1744 = sbr.rel (0) target = $region69
    $region68: #{_forward_impl.1} parent=1 // pred_region
      _
    $region69: #{_forward_impl.1} parent=1 // pred_fallthru
      _
    // Predicated region
    $region70: #{_forward_impl.1} parent=1 // pred_check
      _
    $region71: #{_forward_impl.1} parent=1 // pred_check_branch
      %1746 = sbr.rel (0) target = $region73
    $region72: #{_forward_impl.1} parent=1 // pred_region
      _
    $region73: #{_forward_impl.1} parent=1 // pred_fallthru
      _
    // Predicated region
    $region74: #{_forward_impl.1} parent=1 // pred_check
      _
    $region75: #{_forward_impl.1} parent=1 // pred_check_branch
      %1748 = sbr.rel (0) target = $region77
    $region76: #{_forward_impl.1} parent=1 // pred_region
      _
    $region77: #{_forward_impl.1} parent=1 // pred_fallthru
      _
    %1749 = vsyncpa [#allocation3], 1
    %1750 = vsyncpa [#allocation5], 1
    %1751 = vsyncpa [#allocation8], 1

</llo_original>
